<compile_context>
chip_gen: v7x
topology: tpu7x:2x2x1
jax: 0.10.0
libtpu: 0.0.40
codegen_flags: <defaults>
</compile_context>

<pallas_src>
import jax
import jax.numpy as jnp
from jax.experimental import pallas as pl
from jax.experimental.pallas import tpu as pltpu


# ----------------------------------------------------------------------------
# Helpers
# ----------------------------------------------------------------------------
def _sigmoid(x):
    """sigmoid(x) = 0.5 * (tanh(0.5 x) + 1): one EUP op instead of exp + recip."""
    return 0.5 * jnp.tanh(0.5 * x) + 0.5


# ----------------------------------------------------------------------------
# Fused Pallas kernel (all LSTM layers + FC in one call, no grid)
# ----------------------------------------------------------------------------
def _make_fused_lstm_kernel(num_layers, T, B):
    """Builds the fused kernel for a fixed layer count / sequence length / batch.

    Ref layout (inputs, outputs, scratch — in pallas_call order):
      refs[0]                        x2d      (T*B, D_in)        f32
      refs[1+3l], refs[2+3l],
      refs[3+3l]                     w_ih_l   (D_in_l, 4H)       bf16
                                     w_hh_l   (H, 4H)            bf16
                                     b_l      (1, 4H)            f32 (b_ih + b_hh)
      refs[1+3L]                     w_fc     (H, O)             bf16
      refs[2+3L]                     b_fc     (1, O)             f32
      refs[3+3L]                     out_ref  (B, O)             f32
      refs[4+3L]   (only if L > 1)   seq      (T*B, H)           f32 VMEM scratch
    """

    def kernel(*refs):
        x2d_ref = refs[0]
        layer_refs = refs[1:1 + 3 * num_layers]
        w_fc_ref = refs[1 + 3 * num_layers]
        b_fc_ref = refs[2 + 3 * num_layers]
        out_ref = refs[3 + 3 * num_layers]
        seq_ref = refs[4 + 3 * num_layers] if num_layers > 1 else None

        H = layer_refs[1].shape[0]          # w_hh is (H, 4H)

        h = jnp.zeros((B, H), jnp.float32)
        c = jnp.zeros((B, H), jnp.float32)

        for layer in range(num_layers):
            w_ih_ref = layer_refs[3 * layer + 0]
            w_hh_ref = layer_refs[3 * layer + 1]
            b_ref = layer_refs[3 * layer + 2]
            is_last = layer == num_layers - 1

            # Batched input->gate projection for the whole sequence: one big MXU
            # matmul per layer, bias folded in.  Result (T*B, 4H) f32 stays in vregs.
            x_in = x2d_ref[...] if layer == 0 else seq_ref[...]
            gproj = (
                jnp.dot(x_in.astype(jnp.bfloat16), w_ih_ref[...],
                        preferred_element_type=jnp.float32)
                + b_ref[...]
            )

            W_hh = w_hh_ref[...]            # (H, 4H) bf16, VMEM resident

            # h0 = c0 = 0 for every layer, as in the torch module.
            h = jnp.zeros((B, H), jnp.float32)
            c = jnp.zeros((B, H), jnp.float32)

            # Fully-unrolled time recurrence (T is a small compile-time constant):
            # only the (B,H)@(H,4H) recurrent dot + fp32 gate math per step.
            for t in range(T):
                gates = gproj[t * B:(t + 1) * B, :] + jnp.dot(
                    h.astype(jnp.bfloat16), W_hh,
                    preferred_element_type=jnp.float32)          # (B, 4H) f32

                i_g = _sigmoid(gates[:, 0 * H:1 * H])
                f_g = _sigmoid(gates[:, 1 * H:2 * H])
                g_g = jnp.tanh(gates[:, 2 * H:3 * H])
                o_g = _sigmoid(gates[:, 3 * H:4 * H])

                c = f_g * c + i_g * g_g
                h = o_g * jnp.tanh(c)

                if not is_last:
                    # Layer l-1's outputs were already fully consumed into gproj,
                    # so the single seq buffer can be reused as this layer's output.
                    seq_ref[t * B:(t + 1) * B, :] = h

        # Final FC on the last timestep of the last layer: out = h_T @ W_fc + b_fc.
        out_ref[...] = (
            jnp.dot(h.astype(jnp.bfloat16), w_fc_ref[...],
                    preferred_element_type=jnp.float32)
            + b_fc_ref[...]
        ).astype(out_ref.dtype)

    return kernel


# ----------------------------------------------------------------------------
# Wrapper
# ----------------------------------------------------------------------------
@jax.jit
def lstm_model_forward(x, params):
    """Equivalent of LSTMModel.forward.

    x: (B, T, input_size), batch-first (PyTorch batch_first=True).
    Returns: (B, output_size) float32.
    """
    num_layers = len(params["layers"])
    B, T, _ = x.shape
    # Time-major, flattened over (t, b): row index = t*B + b.
    x2d = jnp.transpose(x, (1, 0, 2)).reshape(T * B, -1).astype(jnp.float32)

    H = params["layers"][0]["b"].shape[-1] // 4
    O = params["w_fc"].shape[-1]

    kernel = _make_fused_lstm_kernel(num_layers, T, B)

    inputs = [x2d]
    for lp in params["layers"]:
        inputs += [lp["w_ih"], lp["w_hh"], lp["b"]]
    inputs += [params["w_fc"], params["b_fc"]]

    vmem_spec = pl.BlockSpec(memory_space=pltpu.MemorySpace.VMEM)

    scratch_shapes = []
    if num_layers > 1:
        scratch_shapes.append(pltpu.VMEM((T * B, H), jnp.float32))  # inter-layer seq

    return pl.pallas_call(
        kernel,
        out_shape=jax.ShapeDtypeStruct((B, O), jnp.float32),
        in_specs=[vmem_spec] * len(inputs),
        out_specs=vmem_spec,
        scratch_shapes=scratch_shapes,
    )(*inputs)


# ----------------------------------------------------------------------------
# Parameter init (mirrors the torch module's shapes; weights transposed + bf16)
# ----------------------------------------------------------------------------
def init_lstm_model_params(key, input_size, hidden_size, output_size, num_layers):
    """Per layer: w_ih (D_in_l, 4H) bf16, w_hh (H, 4H) bf16, b = b_ih + b_hh (1, 4H) f32.
    FC: w_fc (H, O) bf16, b_fc (1, O) f32.  Gate order [i, f, g, o] (PyTorch)."""
    k = 1.0 / jnp.sqrt(hidden_size)
    layers = []
    for layer in range(num_layers):
        d_in = input_size if layer == 0 else hidden_size
        key, k1, k2, k3, k4 = jax.random.split(key, 5)
        w_ih = jax.random.uniform(k1, (d_in, 4 * hidden_size), jnp.float32, -k, k)
        w_hh = jax.random.uniform(k2, (hidden_size, 4 * hidden_size), jnp.float32, -k, k)
        b_ih = jax.random.uniform(k3, (1, 4 * hidden_size), jnp.float32, -k, k)
        b_hh = jax.random.uniform(k4, (1, 4 * hidden_size), jnp.float32, -k, k)
        layers.append({
            "w_ih": w_ih.astype(jnp.bfloat16),
            "w_hh": w_hh.astype(jnp.bfloat16),
            "b": b_ih + b_hh,
        })
    key, k1, k2 = jax.random.split(key, 3)
    w_fc = jax.random.uniform(k1, (hidden_size, output_size), jnp.float32, -k, k)
    b_fc = jax.random.uniform(k2, (1, output_size), jnp.float32, -k, k)
    return {"layers": layers, "w_fc": w_fc.astype(jnp.bfloat16), "b_fc": b_fc}


# ----------------------------------------------------------------------------
# Pure-JAX reference (same dtype path: bf16 matmul inputs, fp32 accumulation)
# ----------------------------------------------------------------------------
def lstm_model_reference(x, params):
    seq = jnp.transpose(x, (1, 0, 2)).astype(jnp.float32)    # (T, B, D_in)
    T, B, _ = seq.shape
    for lp in params["layers"]:
        H = lp["b"].shape[-1] // 4
        h = jnp.zeros((B, H), jnp.float32)
        c = jnp.zeros((B, H), jnp.float32)
        outs = []
        for t in range(T):
            xproj = jnp.dot(seq[t].astype(jnp.bfloat16), lp["w_ih"],
                            preferred_element_type=jnp.float32) + lp["b"]
            gates = xproj + jnp.dot(h.astype(jnp.bfloat16), lp["w_hh"],
                                    preferred_element_type=jnp.float32)
            i = _sigmoid(gates[:, 0 * H:1 * H])
            f = _sigmoid(gates[:, 1 * H:2 * H])
            g = jnp.tanh(gates[:, 2 * H:3 * H])
            o = _sigmoid(gates[:, 3 * H:4 * H])
            c = f * c + i * g
            h = o * jnp.tanh(c)
            outs.append(h)
        seq = jnp.stack(outs, axis=0)
    return (
        jnp.dot(seq[-1].astype(jnp.bfloat16), params["w_fc"],
                preferred_element_type=jnp.float32)
        + params["b_fc"]
    )


# ----------------------------------------------------------------------------
# Main
# ----------------------------------------------------------------------------
if __name__ == "__main__":
    B, T = 2, 8
    INPUT_SIZE, HIDDEN_SIZE, OUTPUT_SIZE, NUM_LAYERS = 16, 32, 8, 2

    root = jax.random.PRNGKey(0)
    k_params, k_x = jax.random.split(root)
    params = init_lstm_model_params(k_params, INPUT_SIZE, HIDDEN_SIZE,
                                    OUTPUT_SIZE, NUM_LAYERS)
    x = jax.random.normal(k_x, (B, T, INPUT_SIZE), jnp.float32)

    out = jax.block_until_ready(lstm_model_forward(x, params))
    assert out.shape == (B, OUTPUT_SIZE), out.shape

    ref = lstm_model_reference(x, params)
    max_err = float(jnp.max(jnp.abs(out - ref)))
    assert max_err < 1e-3, max_err

    print("KERNEL_OK")
</pallas_src>

<mosaic_0001>
module attributes {stable_mosaic.version = 11 : i64} {
  func.func @kernel(%arg0: memref<16x16xf32, #tpu.memory_space<vmem>>, %arg1: memref<16x128xbf16, #tpu.memory_space<vmem>>, %arg2: memref<32x128xbf16, #tpu.memory_space<vmem>>, %arg3: memref<1x128xf32, #tpu.memory_space<vmem>>, %arg4: memref<32x128xbf16, #tpu.memory_space<vmem>>, %arg5: memref<32x128xbf16, #tpu.memory_space<vmem>>, %arg6: memref<1x128xf32, #tpu.memory_space<vmem>>, %arg7: memref<32x8xbf16, #tpu.memory_space<vmem>>, %arg8: memref<1x8xf32, #tpu.memory_space<vmem>>, %arg9: memref<2x8xf32, #tpu.memory_space<vmem>>, %arg10: memref<16x32xf32, #tpu.memory_space<vmem>>) attributes {dimension_semantics = [], scalar_prefetch = 0 : i64, scratch_operands = 1 : i64, tpu.core_type = #tpu.core_type<tc>} {
    %c0 = arith.constant 0 : index
    %c0_0 = arith.constant 0 : index
    %0 = vector.load %arg0[%c0, %c0_0] : memref<16x16xf32, #tpu.memory_space<vmem>>, vector<16x16xf32>
    %1 = arith.truncf %0 : vector<16x16xf32> to vector<16x16xbf16>
    %c0_1 = arith.constant 0 : index
    %c0_2 = arith.constant 0 : index
    %2 = vector.load %arg1[%c0_1, %c0_2] : memref<16x128xbf16, #tpu.memory_space<vmem>>, vector<16x128xbf16>
    %cst = arith.constant dense<0.000000e+00> : vector<16x128xf32>
    %3 = tpu.matmul %1, %2, %cst {dimension_numbers = #tpu.dot_dimension_numbers<[1], [0], [0], [1], [0, 0, 1, 1], [], []>} : vector<16x16xbf16>, vector<16x128xbf16>, vector<16x128xf32> -> vector<16x128xf32>
    %c0_3 = arith.constant 0 : index
    %c0_4 = arith.constant 0 : index
    %4 = vector.load %arg3[%c0_3, %c0_4] : memref<1x128xf32, #tpu.memory_space<vmem>>, vector<1x128xf32>
    %5 = vector.broadcast %4 : vector<1x128xf32> to vector<16x128xf32>
    %6 = arith.addf %3, %5 : vector<16x128xf32>
    %c0_5 = arith.constant 0 : index
    %c0_6 = arith.constant 0 : index
    %7 = vector.load %arg2[%c0_5, %c0_6] : memref<32x128xbf16, #tpu.memory_space<vmem>>, vector<32x128xbf16>
    %cst_7 = arith.constant 0.000000e+00 : f32
    %8 = vector.broadcast %cst_7 : f32 to vector<2x32xf32>
    %cst_8 = arith.constant 0.000000e+00 : f32
    %9 = vector.broadcast %cst_8 : f32 to vector<2x32xf32>
    %10 = vector.extract_strided_slice %6 {offsets = [0, 0], sizes = [2, 128], strides = [1, 1]} : vector<16x128xf32> to vector<2x128xf32>
    %11 = arith.truncf %8 : vector<2x32xf32> to vector<2x32xbf16>
    %cst_9 = arith.constant dense<0.000000e+00> : vector<2x128xf32>
    %12 = tpu.matmul %11, %7, %cst_9 {dimension_numbers = #tpu.dot_dimension_numbers<[1], [0], [0], [1], [0, 0, 1, 1], [], []>} : vector<2x32xbf16>, vector<32x128xbf16>, vector<2x128xf32> -> vector<2x128xf32>
    %13 = arith.addf %10, %12 : vector<2x128xf32>
    %14 = vector.extract_strided_slice %13 {offsets = [0, 0], sizes = [2, 32], strides = [1, 1]} : vector<2x128xf32> to vector<2x32xf32>
    %cst_10 = arith.constant 5.000000e-01 : f32
    %15 = vector.broadcast %cst_10 : f32 to vector<2x32xf32>
    %16 = arith.mulf %15, %14 : vector<2x32xf32>
    %17 = math.tanh %16 : vector<2x32xf32>
    %cst_11 = arith.constant 5.000000e-01 : f32
    %18 = vector.broadcast %cst_11 : f32 to vector<2x32xf32>
    %19 = arith.mulf %18, %17 : vector<2x32xf32>
    %cst_12 = arith.constant 5.000000e-01 : f32
    %20 = vector.broadcast %cst_12 : f32 to vector<2x32xf32>
    %21 = arith.addf %19, %20 : vector<2x32xf32>
    %22 = vector.extract_strided_slice %13 {offsets = [0, 32], sizes = [2, 32], strides = [1, 1]} : vector<2x128xf32> to vector<2x32xf32>
    %cst_13 = arith.constant 5.000000e-01 : f32
    %23 = vector.broadcast %cst_13 : f32 to vector<2x32xf32>
    %24 = arith.mulf %23, %22 : vector<2x32xf32>
    %25 = math.tanh %24 : vector<2x32xf32>
    %cst_14 = arith.constant 5.000000e-01 : f32
    %26 = vector.broadcast %cst_14 : f32 to vector<2x32xf32>
    %27 = arith.mulf %26, %25 : vector<2x32xf32>
    %cst_15 = arith.constant 5.000000e-01 : f32
    %28 = vector.broadcast %cst_15 : f32 to vector<2x32xf32>
    %29 = arith.addf %27, %28 : vector<2x32xf32>
    %30 = vector.extract_strided_slice %13 {offsets = [0, 64], sizes = [2, 32], strides = [1, 1]} : vector<2x128xf32> to vector<2x32xf32>
    %31 = math.tanh %30 : vector<2x32xf32>
    %32 = vector.extract_strided_slice %13 {offsets = [0, 96], sizes = [2, 32], strides = [1, 1]} : vector<2x128xf32> to vector<2x32xf32>
    %cst_16 = arith.constant 5.000000e-01 : f32
    %33 = vector.broadcast %cst_16 : f32 to vector<2x32xf32>
    %34 = arith.mulf %33, %32 : vector<2x32xf32>
    %35 = math.tanh %34 : vector<2x32xf32>
    %cst_17 = arith.constant 5.000000e-01 : f32
    %36 = vector.broadcast %cst_17 : f32 to vector<2x32xf32>
    %37 = arith.mulf %36, %35 : vector<2x32xf32>
    %cst_18 = arith.constant 5.000000e-01 : f32
    %38 = vector.broadcast %cst_18 : f32 to vector<2x32xf32>
    %39 = arith.addf %37, %38 : vector<2x32xf32>
    %40 = arith.mulf %29, %9 : vector<2x32xf32>
    %41 = arith.mulf %21, %31 : vector<2x32xf32>
    %42 = arith.addf %40, %41 : vector<2x32xf32>
    %43 = math.tanh %42 : vector<2x32xf32>
    %44 = arith.mulf %39, %43 : vector<2x32xf32>
    %c0_19 = arith.constant 0 : index
    %c0_20 = arith.constant 0 : index
    %45 = vector.load %arg10[%c0_19, %c0_20] : memref<16x32xf32, #tpu.memory_space<vmem>>, vector<2x32xf32>
    tpu.vector_store %arg10[%c0_19, %c0_20], %44 {strides = array<i32>} : memref<16x32xf32, #tpu.memory_space<vmem>>, vector<2x32xf32>,
    %46 = vector.extract_strided_slice %6 {offsets = [2, 0], sizes = [2, 128], strides = [1, 1]} : vector<16x128xf32> to vector<2x128xf32>
    %47 = arith.truncf %44 : vector<2x32xf32> to vector<2x32xbf16>
    %cst_21 = arith.constant dense<0.000000e+00> : vector<2x128xf32>
    %48 = tpu.matmul %47, %7, %cst_21 {dimension_numbers = #tpu.dot_dimension_numbers<[1], [0], [0], [1], [0, 0, 1, 1], [], []>} : vector<2x32xbf16>, vector<32x128xbf16>, vector<2x128xf32> -> vector<2x128xf32>
    %49 = arith.addf %46, %48 : vector<2x128xf32>
    %50 = vector.extract_strided_slice %49 {offsets = [0, 0], sizes = [2, 32], strides = [1, 1]} : vector<2x128xf32> to vector<2x32xf32>
    %cst_22 = arith.constant 5.000000e-01 : f32
    %51 = vector.broadcast %cst_22 : f32 to vector<2x32xf32>
    %52 = arith.mulf %51, %50 : vector<2x32xf32>
    %53 = math.tanh %52 : vector<2x32xf32>
    %cst_23 = arith.constant 5.000000e-01 : f32
    %54 = vector.broadcast %cst_23 : f32 to vector<2x32xf32>
    %55 = arith.mulf %54, %53 : vector<2x32xf32>
    %cst_24 = arith.constant 5.000000e-01 : f32
    %56 = vector.broadcast %cst_24 : f32 to vector<2x32xf32>
    %57 = arith.addf %55, %56 : vector<2x32xf32>
    %58 = vector.extract_strided_slice %49 {offsets = [0, 32], sizes = [2, 32], strides = [1, 1]} : vector<2x128xf32> to vector<2x32xf32>
    %cst_25 = arith.constant 5.000000e-01 : f32
    %59 = vector.broadcast %cst_25 : f32 to vector<2x32xf32>
    %60 = arith.mulf %59, %58 : vector<2x32xf32>
    %61 = math.tanh %60 : vector<2x32xf32>
    %cst_26 = arith.constant 5.000000e-01 : f32
    %62 = vector.broadcast %cst_26 : f32 to vector<2x32xf32>
    %63 = arith.mulf %62, %61 : vector<2x32xf32>
    %cst_27 = arith.constant 5.000000e-01 : f32
    %64 = vector.broadcast %cst_27 : f32 to vector<2x32xf32>
    %65 = arith.addf %63, %64 : vector<2x32xf32>
    %66 = vector.extract_strided_slice %49 {offsets = [0, 64], sizes = [2, 32], strides = [1, 1]} : vector<2x128xf32> to vector<2x32xf32>
    %67 = math.tanh %66 : vector<2x32xf32>
    %68 = vector.extract_strided_slice %49 {offsets = [0, 96], sizes = [2, 32], strides = [1, 1]} : vector<2x128xf32> to vector<2x32xf32>
    %cst_28 = arith.constant 5.000000e-01 : f32
    %69 = vector.broadcast %cst_28 : f32 to vector<2x32xf32>
    %70 = arith.mulf %69, %68 : vector<2x32xf32>
    %71 = math.tanh %70 : vector<2x32xf32>
    %cst_29 = arith.constant 5.000000e-01 : f32
    %72 = vector.broadcast %cst_29 : f32 to vector<2x32xf32>
    %73 = arith.mulf %72, %71 : vector<2x32xf32>
    %cst_30 = arith.constant 5.000000e-01 : f32
    %74 = vector.broadcast %cst_30 : f32 to vector<2x32xf32>
    %75 = arith.addf %73, %74 : vector<2x32xf32>
    %76 = arith.mulf %65, %42 : vector<2x32xf32>
    %77 = arith.mulf %57, %67 : vector<2x32xf32>
    %78 = arith.addf %76, %77 : vector<2x32xf32>
    %79 = math.tanh %78 : vector<2x32xf32>
    %80 = arith.mulf %75, %79 : vector<2x32xf32>
    %c2 = arith.constant 2 : index
    %c0_31 = arith.constant 0 : index
    %81 = vector.load %arg10[%c2, %c0_31] : memref<16x32xf32, #tpu.memory_space<vmem>>, vector<2x32xf32>
    tpu.vector_store %arg10[%c2, %c0_31], %80 {strides = array<i32>} : memref<16x32xf32, #tpu.memory_space<vmem>>, vector<2x32xf32>,
    %82 = vector.extract_strided_slice %6 {offsets = [4, 0], sizes = [2, 128], strides = [1, 1]} : vector<16x128xf32> to vector<2x128xf32>
    %83 = arith.truncf %80 : vector<2x32xf32> to vector<2x32xbf16>
    %cst_32 = arith.constant dense<0.000000e+00> : vector<2x128xf32>
    %84 = tpu.matmul %83, %7, %cst_32 {dimension_numbers = #tpu.dot_dimension_numbers<[1], [0], [0], [1], [0, 0, 1, 1], [], []>} : vector<2x32xbf16>, vector<32x128xbf16>, vector<2x128xf32> -> vector<2x128xf32>
    %85 = arith.addf %82, %84 : vector<2x128xf32>
    %86 = vector.extract_strided_slice %85 {offsets = [0, 0], sizes = [2, 32], strides = [1, 1]} : vector<2x128xf32> to vector<2x32xf32>
    %cst_33 = arith.constant 5.000000e-01 : f32
    %87 = vector.broadcast %cst_33 : f32 to vector<2x32xf32>
    %88 = arith.mulf %87, %86 : vector<2x32xf32>
    %89 = math.tanh %88 : vector<2x32xf32>
    %cst_34 = arith.constant 5.000000e-01 : f32
    %90 = vector.broadcast %cst_34 : f32 to vector<2x32xf32>
    %91 = arith.mulf %90, %89 : vector<2x32xf32>
    %cst_35 = arith.constant 5.000000e-01 : f32
    %92 = vector.broadcast %cst_35 : f32 to vector<2x32xf32>
    %93 = arith.addf %91, %92 : vector<2x32xf32>
    %94 = vector.extract_strided_slice %85 {offsets = [0, 32], sizes = [2, 32], strides = [1, 1]} : vector<2x128xf32> to vector<2x32xf32>
    %cst_36 = arith.constant 5.000000e-01 : f32
    %95 = vector.broadcast %cst_36 : f32 to vector<2x32xf32>
    %96 = arith.mulf %95, %94 : vector<2x32xf32>
    %97 = math.tanh %96 : vector<2x32xf32>
    %cst_37 = arith.constant 5.000000e-01 : f32
    %98 = vector.broadcast %cst_37 : f32 to vector<2x32xf32>
    %99 = arith.mulf %98, %97 : vector<2x32xf32>
    %cst_38 = arith.constant 5.000000e-01 : f32
    %100 = vector.broadcast %cst_38 : f32 to vector<2x32xf32>
    %101 = arith.addf %99, %100 : vector<2x32xf32>
    %102 = vector.extract_strided_slice %85 {offsets = [0, 64], sizes = [2, 32], strides = [1, 1]} : vector<2x128xf32> to vector<2x32xf32>
    %103 = math.tanh %102 : vector<2x32xf32>
    %104 = vector.extract_strided_slice %85 {offsets = [0, 96], sizes = [2, 32], strides = [1, 1]} : vector<2x128xf32> to vector<2x32xf32>
    %cst_39 = arith.constant 5.000000e-01 : f32
    %105 = vector.broadcast %cst_39 : f32 to vector<2x32xf32>
    %106 = arith.mulf %105, %104 : vector<2x32xf32>
    %107 = math.tanh %106 : vector<2x32xf32>
    %cst_40 = arith.constant 5.000000e-01 : f32
    %108 = vector.broadcast %cst_40 : f32 to vector<2x32xf32>
    %109 = arith.mulf %108, %107 : vector<2x32xf32>
    %cst_41 = arith.constant 5.000000e-01 : f32
    %110 = vector.broadcast %cst_41 : f32 to vector<2x32xf32>
    %111 = arith.addf %109, %110 : vector<2x32xf32>
    %112 = arith.mulf %101, %78 : vector<2x32xf32>
    %113 = arith.mulf %93, %103 : vector<2x32xf32>
    %114 = arith.addf %112, %113 : vector<2x32xf32>
    %115 = math.tanh %114 : vector<2x32xf32>
    %116 = arith.mulf %111, %115 : vector<2x32xf32>
    %c4 = arith.constant 4 : index
    %c0_42 = arith.constant 0 : index
    %117 = vector.load %arg10[%c4, %c0_42] : memref<16x32xf32, #tpu.memory_space<vmem>>, vector<2x32xf32>
    tpu.vector_store %arg10[%c4, %c0_42], %116 {strides = array<i32>} : memref<16x32xf32, #tpu.memory_space<vmem>>, vector<2x32xf32>,
    %118 = vector.extract_strided_slice %6 {offsets = [6, 0], sizes = [2, 128], strides = [1, 1]} : vector<16x128xf32> to vector<2x128xf32>
    %119 = arith.truncf %116 : vector<2x32xf32> to vector<2x32xbf16>
    %cst_43 = arith.constant dense<0.000000e+00> : vector<2x128xf32>
    %120 = tpu.matmul %119, %7, %cst_43 {dimension_numbers = #tpu.dot_dimension_numbers<[1], [0], [0], [1], [0, 0, 1, 1], [], []>} : vector<2x32xbf16>, vector<32x128xbf16>, vector<2x128xf32> -> vector<2x128xf32>
    %121 = arith.addf %118, %120 : vector<2x128xf32>
    %122 = vector.extract_strided_slice %121 {offsets = [0, 0], sizes = [2, 32], strides = [1, 1]} : vector<2x128xf32> to vector<2x32xf32>
    %cst_44 = arith.constant 5.000000e-01 : f32
    %123 = vector.broadcast %cst_44 : f32 to vector<2x32xf32>
    %124 = arith.mulf %123, %122 : vector<2x32xf32>
    %125 = math.tanh %124 : vector<2x32xf32>
    %cst_45 = arith.constant 5.000000e-01 : f32
    %126 = vector.broadcast %cst_45 : f32 to vector<2x32xf32>
    %127 = arith.mulf %126, %125 : vector<2x32xf32>
    %cst_46 = arith.constant 5.000000e-01 : f32
    %128 = vector.broadcast %cst_46 : f32 to vector<2x32xf32>
    %129 = arith.addf %127, %128 : vector<2x32xf32>
    %130 = vector.extract_strided_slice %121 {offsets = [0, 32], sizes = [2, 32], strides = [1, 1]} : vector<2x128xf32> to vector<2x32xf32>
    %cst_47 = arith.constant 5.000000e-01 : f32
    %131 = vector.broadcast %cst_47 : f32 to vector<2x32xf32>
    %132 = arith.mulf %131, %130 : vector<2x32xf32>
    %133 = math.tanh %132 : vector<2x32xf32>
    %cst_48 = arith.constant 5.000000e-01 : f32
    %134 = vector.broadcast %cst_48 : f32 to vector<2x32xf32>
    %135 = arith.mulf %134, %133 : vector<2x32xf32>
    %cst_49 = arith.constant 5.000000e-01 : f32
    %136 = vector.broadcast %cst_49 : f32 to vector<2x32xf32>
    %137 = arith.addf %135, %136 : vector<2x32xf32>
    %138 = vector.extract_strided_slice %121 {offsets = [0, 64], sizes = [2, 32], strides = [1, 1]} : vector<2x128xf32> to vector<2x32xf32>
    %139 = math.tanh %138 : vector<2x32xf32>
    %140 = vector.extract_strided_slice %121 {offsets = [0, 96], sizes = [2, 32], strides = [1, 1]} : vector<2x128xf32> to vector<2x32xf32>
    %cst_50 = arith.constant 5.000000e-01 : f32
    %141 = vector.broadcast %cst_50 : f32 to vector<2x32xf32>
    %142 = arith.mulf %141, %140 : vector<2x32xf32>
    %143 = math.tanh %142 : vector<2x32xf32>
    %cst_51 = arith.constant 5.000000e-01 : f32
    %144 = vector.broadcast %cst_51 : f32 to vector<2x32xf32>
    %145 = arith.mulf %144, %143 : vector<2x32xf32>
    %cst_52 = arith.constant 5.000000e-01 : f32
    %146 = vector.broadcast %cst_52 : f32 to vector<2x32xf32>
    %147 = arith.addf %145, %146 : vector<2x32xf32>
    %148 = arith.mulf %137, %114 : vector<2x32xf32>
    %149 = arith.mulf %129, %139 : vector<2x32xf32>
    %150 = arith.addf %148, %149 : vector<2x32xf32>
    %151 = math.tanh %150 : vector<2x32xf32>
    %152 = arith.mulf %147, %151 : vector<2x32xf32>
    %c6 = arith.constant 6 : index
    %c0_53 = arith.constant 0 : index
    %153 = vector.load %arg10[%c6, %c0_53] : memref<16x32xf32, #tpu.memory_space<vmem>>, vector<2x32xf32>
    tpu.vector_store %arg10[%c6, %c0_53], %152 {strides = array<i32>} : memref<16x32xf32, #tpu.memory_space<vmem>>, vector<2x32xf32>,
    %154 = vector.extract_strided_slice %6 {offsets = [8, 0], sizes = [2, 128], strides = [1, 1]} : vector<16x128xf32> to vector<2x128xf32>
    %155 = arith.truncf %152 : vector<2x32xf32> to vector<2x32xbf16>
    %cst_54 = arith.constant dense<0.000000e+00> : vector<2x128xf32>
    %156 = tpu.matmul %155, %7, %cst_54 {dimension_numbers = #tpu.dot_dimension_numbers<[1], [0], [0], [1], [0, 0, 1, 1], [], []>} : vector<2x32xbf16>, vector<32x128xbf16>, vector<2x128xf32> -> vector<2x128xf32>
    %157 = arith.addf %154, %156 : vector<2x128xf32>
    %158 = vector.extract_strided_slice %157 {offsets = [0, 0], sizes = [2, 32], strides = [1, 1]} : vector<2x128xf32> to vector<2x32xf32>
    %cst_55 = arith.constant 5.000000e-01 : f32
    %159 = vector.broadcast %cst_55 : f32 to vector<2x32xf32>
    %160 = arith.mulf %159, %158 : vector<2x32xf32>
    %161 = math.tanh %160 : vector<2x32xf32>
    %cst_56 = arith.constant 5.000000e-01 : f32
    %162 = vector.broadcast %cst_56 : f32 to vector<2x32xf32>
    %163 = arith.mulf %162, %161 : vector<2x32xf32>
    %cst_57 = arith.constant 5.000000e-01 : f32
    %164 = vector.broadcast %cst_57 : f32 to vector<2x32xf32>
    %165 = arith.addf %163, %164 : vector<2x32xf32>
    %166 = vector.extract_strided_slice %157 {offsets = [0, 32], sizes = [2, 32], strides = [1, 1]} : vector<2x128xf32> to vector<2x32xf32>
    %cst_58 = arith.constant 5.000000e-01 : f32
    %167 = vector.broadcast %cst_58 : f32 to vector<2x32xf32>
    %168 = arith.mulf %167, %166 : vector<2x32xf32>
    %169 = math.tanh %168 : vector<2x32xf32>
    %cst_59 = arith.constant 5.000000e-01 : f32
    %170 = vector.broadcast %cst_59 : f32 to vector<2x32xf32>
    %171 = arith.mulf %170, %169 : vector<2x32xf32>
    %cst_60 = arith.constant 5.000000e-01 : f32
    %172 = vector.broadcast %cst_60 : f32 to vector<2x32xf32>
    %173 = arith.addf %171, %172 : vector<2x32xf32>
    %174 = vector.extract_strided_slice %157 {offsets = [0, 64], sizes = [2, 32], strides = [1, 1]} : vector<2x128xf32> to vector<2x32xf32>
    %175 = math.tanh %174 : vector<2x32xf32>
    %176 = vector.extract_strided_slice %157 {offsets = [0, 96], sizes = [2, 32], strides = [1, 1]} : vector<2x128xf32> to vector<2x32xf32>
    %cst_61 = arith.constant 5.000000e-01 : f32
    %177 = vector.broadcast %cst_61 : f32 to vector<2x32xf32>
    %178 = arith.mulf %177, %176 : vector<2x32xf32>
    %179 = math.tanh %178 : vector<2x32xf32>
    %cst_62 = arith.constant 5.000000e-01 : f32
    %180 = vector.broadcast %cst_62 : f32 to vector<2x32xf32>
    %181 = arith.mulf %180, %179 : vector<2x32xf32>
    %cst_63 = arith.constant 5.000000e-01 : f32
    %182 = vector.broadcast %cst_63 : f32 to vector<2x32xf32>
    %183 = arith.addf %181, %182 : vector<2x32xf32>
    %184 = arith.mulf %173, %150 : vector<2x32xf32>
    %185 = arith.mulf %165, %175 : vector<2x32xf32>
    %186 = arith.addf %184, %185 : vector<2x32xf32>
    %187 = math.tanh %186 : vector<2x32xf32>
    %188 = arith.mulf %183, %187 : vector<2x32xf32>
    %c8 = arith.constant 8 : index
    %c0_64 = arith.constant 0 : index
    %189 = vector.load %arg10[%c8, %c0_64] : memref<16x32xf32, #tpu.memory_space<vmem>>, vector<2x32xf32>
    tpu.vector_store %arg10[%c8, %c0_64], %188 {strides = array<i32>} : memref<16x32xf32, #tpu.memory_space<vmem>>, vector<2x32xf32>,
    %190 = vector.extract_strided_slice %6 {offsets = [10, 0], sizes = [2, 128], strides = [1, 1]} : vector<16x128xf32> to vector<2x128xf32>
    %191 = arith.truncf %188 : vector<2x32xf32> to vector<2x32xbf16>
    %cst_65 = arith.constant dense<0.000000e+00> : vector<2x128xf32>
    %192 = tpu.matmul %191, %7, %cst_65 {dimension_numbers = #tpu.dot_dimension_numbers<[1], [0], [0], [1], [0, 0, 1, 1], [], []>} : vector<2x32xbf16>, vector<32x128xbf16>, vector<2x128xf32> -> vector<2x128xf32>
    %193 = arith.addf %190, %192 : vector<2x128xf32>
    %194 = vector.extract_strided_slice %193 {offsets = [0, 0], sizes = [2, 32], strides = [1, 1]} : vector<2x128xf32> to vector<2x32xf32>
    %cst_66 = arith.constant 5.000000e-01 : f32
    %195 = vector.broadcast %cst_66 : f32 to vector<2x32xf32>
    %196 = arith.mulf %195, %194 : vector<2x32xf32>
    %197 = math.tanh %196 : vector<2x32xf32>
    %cst_67 = arith.constant 5.000000e-01 : f32
    %198 = vector.broadcast %cst_67 : f32 to vector<2x32xf32>
    %199 = arith.mulf %198, %197 : vector<2x32xf32>
    %cst_68 = arith.constant 5.000000e-01 : f32
    %200 = vector.broadcast %cst_68 : f32 to vector<2x32xf32>
    %201 = arith.addf %199, %200 : vector<2x32xf32>
    %202 = vector.extract_strided_slice %193 {offsets = [0, 32], sizes = [2, 32], strides = [1, 1]} : vector<2x128xf32> to vector<2x32xf32>
    %cst_69 = arith.constant 5.000000e-01 : f32
    %203 = vector.broadcast %cst_69 : f32 to vector<2x32xf32>
    %204 = arith.mulf %203, %202 : vector<2x32xf32>
    %205 = math.tanh %204 : vector<2x32xf32>
    %cst_70 = arith.constant 5.000000e-01 : f32
    %206 = vector.broadcast %cst_70 : f32 to vector<2x32xf32>
    %207 = arith.mulf %206, %205 : vector<2x32xf32>
    %cst_71 = arith.constant 5.000000e-01 : f32
    %208 = vector.broadcast %cst_71 : f32 to vector<2x32xf32>
    %209 = arith.addf %207, %208 : vector<2x32xf32>
    %210 = vector.extract_strided_slice %193 {offsets = [0, 64], sizes = [2, 32], strides = [1, 1]} : vector<2x128xf32> to vector<2x32xf32>
    %211 = math.tanh %210 : vector<2x32xf32>
    %212 = vector.extract_strided_slice %193 {offsets = [0, 96], sizes = [2, 32], strides = [1, 1]} : vector<2x128xf32> to vector<2x32xf32>
    %cst_72 = arith.constant 5.000000e-01 : f32
    %213 = vector.broadcast %cst_72 : f32 to vector<2x32xf32>
    %214 = arith.mulf %213, %212 : vector<2x32xf32>
    %215 = math.tanh %214 : vector<2x32xf32>
    %cst_73 = arith.constant 5.000000e-01 : f32
    %216 = vector.broadcast %cst_73 : f32 to vector<2x32xf32>
    %217 = arith.mulf %216, %215 : vector<2x32xf32>
    %cst_74 = arith.constant 5.000000e-01 : f32
    %218 = vector.broadcast %cst_74 : f32 to vector<2x32xf32>
    %219 = arith.addf %217, %218 : vector<2x32xf32>
    %220 = arith.mulf %209, %186 : vector<2x32xf32>
    %221 = arith.mulf %201, %211 : vector<2x32xf32>
    %222 = arith.addf %220, %221 : vector<2x32xf32>
    %223 = math.tanh %222 : vector<2x32xf32>
    %224 = arith.mulf %219, %223 : vector<2x32xf32>
    %c10 = arith.constant 10 : index
    %c0_75 = arith.constant 0 : index
    %225 = vector.load %arg10[%c10, %c0_75] : memref<16x32xf32, #tpu.memory_space<vmem>>, vector<2x32xf32>
    tpu.vector_store %arg10[%c10, %c0_75], %224 {strides = array<i32>} : memref<16x32xf32, #tpu.memory_space<vmem>>, vector<2x32xf32>,
    %226 = vector.extract_strided_slice %6 {offsets = [12, 0], sizes = [2, 128], strides = [1, 1]} : vector<16x128xf32> to vector<2x128xf32>
    %227 = arith.truncf %224 : vector<2x32xf32> to vector<2x32xbf16>
    %cst_76 = arith.constant dense<0.000000e+00> : vector<2x128xf32>
    %228 = tpu.matmul %227, %7, %cst_76 {dimension_numbers = #tpu.dot_dimension_numbers<[1], [0], [0], [1], [0, 0, 1, 1], [], []>} : vector<2x32xbf16>, vector<32x128xbf16>, vector<2x128xf32> -> vector<2x128xf32>
    %229 = arith.addf %226, %228 : vector<2x128xf32>
    %230 = vector.extract_strided_slice %229 {offsets = [0, 0], sizes = [2, 32], strides = [1, 1]} : vector<2x128xf32> to vector<2x32xf32>
    %cst_77 = arith.constant 5.000000e-01 : f32
    %231 = vector.broadcast %cst_77 : f32 to vector<2x32xf32>
    %232 = arith.mulf %231, %230 : vector<2x32xf32>
    %233 = math.tanh %232 : vector<2x32xf32>
    %cst_78 = arith.constant 5.000000e-01 : f32
    %234 = vector.broadcast %cst_78 : f32 to vector<2x32xf32>
    %235 = arith.mulf %234, %233 : vector<2x32xf32>
    %cst_79 = arith.constant 5.000000e-01 : f32
    %236 = vector.broadcast %cst_79 : f32 to vector<2x32xf32>
    %237 = arith.addf %235, %236 : vector<2x32xf32>
    %238 = vector.extract_strided_slice %229 {offsets = [0, 32], sizes = [2, 32], strides = [1, 1]} : vector<2x128xf32> to vector<2x32xf32>
    %cst_80 = arith.constant 5.000000e-01 : f32
    %239 = vector.broadcast %cst_80 : f32 to vector<2x32xf32>
    %240 = arith.mulf %239, %238 : vector<2x32xf32>
    %241 = math.tanh %240 : vector<2x32xf32>
    %cst_81 = arith.constant 5.000000e-01 : f32
    %242 = vector.broadcast %cst_81 : f32 to vector<2x32xf32>
    %243 = arith.mulf %242, %241 : vector<2x32xf32>
    %cst_82 = arith.constant 5.000000e-01 : f32
    %244 = vector.broadcast %cst_82 : f32 to vector<2x32xf32>
    %245 = arith.addf %243, %244 : vector<2x32xf32>
    %246 = vector.extract_strided_slice %229 {offsets = [0, 64], sizes = [2, 32], strides = [1, 1]} : vector<2x128xf32> to vector<2x32xf32>
    %247 = math.tanh %246 : vector<2x32xf32>
    %248 = vector.extract_strided_slice %229 {offsets = [0, 96], sizes = [2, 32], strides = [1, 1]} : vector<2x128xf32> to vector<2x32xf32>
    %cst_83 = arith.constant 5.000000e-01 : f32
    %249 = vector.broadcast %cst_83 : f32 to vector<2x32xf32>
    %250 = arith.mulf %249, %248 : vector<2x32xf32>
    %251 = math.tanh %250 : vector<2x32xf32>
    %cst_84 = arith.constant 5.000000e-01 : f32
    %252 = vector.broadcast %cst_84 : f32 to vector<2x32xf32>
    %253 = arith.mulf %252, %251 : vector<2x32xf32>
    %cst_85 = arith.constant 5.000000e-01 : f32
    %254 = vector.broadcast %cst_85 : f32 to vector<2x32xf32>
    %255 = arith.addf %253, %254 : vector<2x32xf32>
    %256 = arith.mulf %245, %222 : vector<2x32xf32>
    %257 = arith.mulf %237, %247 : vector<2x32xf32>
    %258 = arith.addf %256, %257 : vector<2x32xf32>
    %259 = math.tanh %258 : vector<2x32xf32>
    %260 = arith.mulf %255, %259 : vector<2x32xf32>
    %c12 = arith.constant 12 : index
    %c0_86 = arith.constant 0 : index
    %261 = vector.load %arg10[%c12, %c0_86] : memref<16x32xf32, #tpu.memory_space<vmem>>, vector<2x32xf32>
    tpu.vector_store %arg10[%c12, %c0_86], %260 {strides = array<i32>} : memref<16x32xf32, #tpu.memory_space<vmem>>, vector<2x32xf32>,
    %262 = vector.extract_strided_slice %6 {offsets = [14, 0], sizes = [2, 128], strides = [1, 1]} : vector<16x128xf32> to vector<2x128xf32>
    %263 = arith.truncf %260 : vector<2x32xf32> to vector<2x32xbf16>
    %cst_87 = arith.constant dense<0.000000e+00> : vector<2x128xf32>
    %264 = tpu.matmul %263, %7, %cst_87 {dimension_numbers = #tpu.dot_dimension_numbers<[1], [0], [0], [1], [0, 0, 1, 1], [], []>} : vector<2x32xbf16>, vector<32x128xbf16>, vector<2x128xf32> -> vector<2x128xf32>
    %265 = arith.addf %262, %264 : vector<2x128xf32>
    %266 = vector.extract_strided_slice %265 {offsets = [0, 0], sizes = [2, 32], strides = [1, 1]} : vector<2x128xf32> to vector<2x32xf32>
    %cst_88 = arith.constant 5.000000e-01 : f32
    %267 = vector.broadcast %cst_88 : f32 to vector<2x32xf32>
    %268 = arith.mulf %267, %266 : vector<2x32xf32>
    %269 = math.tanh %268 : vector<2x32xf32>
    %cst_89 = arith.constant 5.000000e-01 : f32
    %270 = vector.broadcast %cst_89 : f32 to vector<2x32xf32>
    %271 = arith.mulf %270, %269 : vector<2x32xf32>
    %cst_90 = arith.constant 5.000000e-01 : f32
    %272 = vector.broadcast %cst_90 : f32 to vector<2x32xf32>
    %273 = arith.addf %271, %272 : vector<2x32xf32>
    %274 = vector.extract_strided_slice %265 {offsets = [0, 32], sizes = [2, 32], strides = [1, 1]} : vector<2x128xf32> to vector<2x32xf32>
    %cst_91 = arith.constant 5.000000e-01 : f32
    %275 = vector.broadcast %cst_91 : f32 to vector<2x32xf32>
    %276 = arith.mulf %275, %274 : vector<2x32xf32>
    %277 = math.tanh %276 : vector<2x32xf32>
    %cst_92 = arith.constant 5.000000e-01 : f32
    %278 = vector.broadcast %cst_92 : f32 to vector<2x32xf32>
    %279 = arith.mulf %278, %277 : vector<2x32xf32>
    %cst_93 = arith.constant 5.000000e-01 : f32
    %280 = vector.broadcast %cst_93 : f32 to vector<2x32xf32>
    %281 = arith.addf %279, %280 : vector<2x32xf32>
    %282 = vector.extract_strided_slice %265 {offsets = [0, 64], sizes = [2, 32], strides = [1, 1]} : vector<2x128xf32> to vector<2x32xf32>
    %283 = math.tanh %282 : vector<2x32xf32>
    %284 = vector.extract_strided_slice %265 {offsets = [0, 96], sizes = [2, 32], strides = [1, 1]} : vector<2x128xf32> to vector<2x32xf32>
    %cst_94 = arith.constant 5.000000e-01 : f32
    %285 = vector.broadcast %cst_94 : f32 to vector<2x32xf32>
    %286 = arith.mulf %285, %284 : vector<2x32xf32>
    %287 = math.tanh %286 : vector<2x32xf32>
    %cst_95 = arith.constant 5.000000e-01 : f32
    %288 = vector.broadcast %cst_95 : f32 to vector<2x32xf32>
    %289 = arith.mulf %288, %287 : vector<2x32xf32>
    %cst_96 = arith.constant 5.000000e-01 : f32
    %290 = vector.broadcast %cst_96 : f32 to vector<2x32xf32>
    %291 = arith.addf %289, %290 : vector<2x32xf32>
    %292 = arith.mulf %281, %258 : vector<2x32xf32>
    %293 = arith.mulf %273, %283 : vector<2x32xf32>
    %294 = arith.addf %292, %293 : vector<2x32xf32>
    %295 = math.tanh %294 : vector<2x32xf32>
    %296 = arith.mulf %291, %295 : vector<2x32xf32>
    %c14 = arith.constant 14 : index
    %c0_97 = arith.constant 0 : index
    %297 = vector.load %arg10[%c14, %c0_97] : memref<16x32xf32, #tpu.memory_space<vmem>>, vector<2x32xf32>
    tpu.vector_store %arg10[%c14, %c0_97], %296 {strides = array<i32>} : memref<16x32xf32, #tpu.memory_space<vmem>>, vector<2x32xf32>,
    %c0_98 = arith.constant 0 : index
    %c0_99 = arith.constant 0 : index
    %298 = vector.load %arg10[%c0_98, %c0_99] : memref<16x32xf32, #tpu.memory_space<vmem>>, vector<16x32xf32>
    %299 = arith.truncf %298 : vector<16x32xf32> to vector<16x32xbf16>
    %c0_100 = arith.constant 0 : index
    %c0_101 = arith.constant 0 : index
    %300 = vector.load %arg4[%c0_100, %c0_101] : memref<32x128xbf16, #tpu.memory_space<vmem>>, vector<32x128xbf16>
    %cst_102 = arith.constant dense<0.000000e+00> : vector<16x128xf32>
    %301 = tpu.matmul %299, %300, %cst_102 {dimension_numbers = #tpu.dot_dimension_numbers<[1], [0], [0], [1], [0, 0, 1, 1], [], []>} : vector<16x32xbf16>, vector<32x128xbf16>, vector<16x128xf32> -> vector<16x128xf32>
    %c0_103 = arith.constant 0 : index
    %c0_104 = arith.constant 0 : index
    %302 = vector.load %arg6[%c0_103, %c0_104] : memref<1x128xf32, #tpu.memory_space<vmem>>, vector<1x128xf32>
    %303 = vector.broadcast %302 : vector<1x128xf32> to vector<16x128xf32>
    %304 = arith.addf %301, %303 : vector<16x128xf32>
    %c0_105 = arith.constant 0 : index
    %c0_106 = arith.constant 0 : index
    %305 = vector.load %arg5[%c0_105, %c0_106] : memref<32x128xbf16, #tpu.memory_space<vmem>>, vector<32x128xbf16>
    %cst_107 = arith.constant 0.000000e+00 : f32
    %306 = vector.broadcast %cst_107 : f32 to vector<2x32xf32>
    %cst_108 = arith.constant 0.000000e+00 : f32
    %307 = vector.broadcast %cst_108 : f32 to vector<2x32xf32>
    %308 = vector.extract_strided_slice %304 {offsets = [0, 0], sizes = [2, 128], strides = [1, 1]} : vector<16x128xf32> to vector<2x128xf32>
    %309 = arith.truncf %306 : vector<2x32xf32> to vector<2x32xbf16>
    %cst_109 = arith.constant dense<0.000000e+00> : vector<2x128xf32>
    %310 = tpu.matmul %309, %305, %cst_109 {dimension_numbers = #tpu.dot_dimension_numbers<[1], [0], [0], [1], [0, 0, 1, 1], [], []>} : vector<2x32xbf16>, vector<32x128xbf16>, vector<2x128xf32> -> vector<2x128xf32>
    %311 = arith.addf %308, %310 : vector<2x128xf32>
    %312 = vector.extract_strided_slice %311 {offsets = [0, 0], sizes = [2, 32], strides = [1, 1]} : vector<2x128xf32> to vector<2x32xf32>
    %cst_110 = arith.constant 5.000000e-01 : f32
    %313 = vector.broadcast %cst_110 : f32 to vector<2x32xf32>
    %314 = arith.mulf %313, %312 : vector<2x32xf32>
    %315 = math.tanh %314 : vector<2x32xf32>
    %cst_111 = arith.constant 5.000000e-01 : f32
    %316 = vector.broadcast %cst_111 : f32 to vector<2x32xf32>
    %317 = arith.mulf %316, %315 : vector<2x32xf32>
    %cst_112 = arith.constant 5.000000e-01 : f32
    %318 = vector.broadcast %cst_112 : f32 to vector<2x32xf32>
    %319 = arith.addf %317, %318 : vector<2x32xf32>
    %320 = vector.extract_strided_slice %311 {offsets = [0, 32], sizes = [2, 32], strides = [1, 1]} : vector<2x128xf32> to vector<2x32xf32>
    %cst_113 = arith.constant 5.000000e-01 : f32
    %321 = vector.broadcast %cst_113 : f32 to vector<2x32xf32>
    %322 = arith.mulf %321, %320 : vector<2x32xf32>
    %323 = math.tanh %322 : vector<2x32xf32>
    %cst_114 = arith.constant 5.000000e-01 : f32
    %324 = vector.broadcast %cst_114 : f32 to vector<2x32xf32>
    %325 = arith.mulf %324, %323 : vector<2x32xf32>
    %cst_115 = arith.constant 5.000000e-01 : f32
    %326 = vector.broadcast %cst_115 : f32 to vector<2x32xf32>
    %327 = arith.addf %325, %326 : vector<2x32xf32>
    %328 = vector.extract_strided_slice %311 {offsets = [0, 64], sizes = [2, 32], strides = [1, 1]} : vector<2x128xf32> to vector<2x32xf32>
    %329 = math.tanh %328 : vector<2x32xf32>
    %330 = vector.extract_strided_slice %311 {offsets = [0, 96], sizes = [2, 32], strides = [1, 1]} : vector<2x128xf32> to vector<2x32xf32>
    %cst_116 = arith.constant 5.000000e-01 : f32
    %331 = vector.broadcast %cst_116 : f32 to vector<2x32xf32>
    %332 = arith.mulf %331, %330 : vector<2x32xf32>
    %333 = math.tanh %332 : vector<2x32xf32>
    %cst_117 = arith.constant 5.000000e-01 : f32
    %334 = vector.broadcast %cst_117 : f32 to vector<2x32xf32>
    %335 = arith.mulf %334, %333 : vector<2x32xf32>
    %cst_118 = arith.constant 5.000000e-01 : f32
    %336 = vector.broadcast %cst_118 : f32 to vector<2x32xf32>
    %337 = arith.addf %335, %336 : vector<2x32xf32>
    %338 = arith.mulf %327, %307 : vector<2x32xf32>
    %339 = arith.mulf %319, %329 : vector<2x32xf32>
    %340 = arith.addf %338, %339 : vector<2x32xf32>
    %341 = math.tanh %340 : vector<2x32xf32>
    %342 = arith.mulf %337, %341 : vector<2x32xf32>
    %343 = vector.extract_strided_slice %304 {offsets = [2, 0], sizes = [2, 128], strides = [1, 1]} : vector<16x128xf32> to vector<2x128xf32>
    %344 = arith.truncf %342 : vector<2x32xf32> to vector<2x32xbf16>
    %cst_119 = arith.constant dense<0.000000e+00> : vector<2x128xf32>
    %345 = tpu.matmul %344, %305, %cst_119 {dimension_numbers = #tpu.dot_dimension_numbers<[1], [0], [0], [1], [0, 0, 1, 1], [], []>} : vector<2x32xbf16>, vector<32x128xbf16>, vector<2x128xf32> -> vector<2x128xf32>
    %346 = arith.addf %343, %345 : vector<2x128xf32>
    %347 = vector.extract_strided_slice %346 {offsets = [0, 0], sizes = [2, 32], strides = [1, 1]} : vector<2x128xf32> to vector<2x32xf32>
    %cst_120 = arith.constant 5.000000e-01 : f32
    %348 = vector.broadcast %cst_120 : f32 to vector<2x32xf32>
    %349 = arith.mulf %348, %347 : vector<2x32xf32>
    %350 = math.tanh %349 : vector<2x32xf32>
    %cst_121 = arith.constant 5.000000e-01 : f32
    %351 = vector.broadcast %cst_121 : f32 to vector<2x32xf32>
    %352 = arith.mulf %351, %350 : vector<2x32xf32>
    %cst_122 = arith.constant 5.000000e-01 : f32
    %353 = vector.broadcast %cst_122 : f32 to vector<2x32xf32>
    %354 = arith.addf %352, %353 : vector<2x32xf32>
    %355 = vector.extract_strided_slice %346 {offsets = [0, 32], sizes = [2, 32], strides = [1, 1]} : vector<2x128xf32> to vector<2x32xf32>
    %cst_123 = arith.constant 5.000000e-01 : f32
    %356 = vector.broadcast %cst_123 : f32 to vector<2x32xf32>
    %357 = arith.mulf %356, %355 : vector<2x32xf32>
    %358 = math.tanh %357 : vector<2x32xf32>
    %cst_124 = arith.constant 5.000000e-01 : f32
    %359 = vector.broadcast %cst_124 : f32 to vector<2x32xf32>
    %360 = arith.mulf %359, %358 : vector<2x32xf32>
    %cst_125 = arith.constant 5.000000e-01 : f32
    %361 = vector.broadcast %cst_125 : f32 to vector<2x32xf32>
    %362 = arith.addf %360, %361 : vector<2x32xf32>
    %363 = vector.extract_strided_slice %346 {offsets = [0, 64], sizes = [2, 32], strides = [1, 1]} : vector<2x128xf32> to vector<2x32xf32>
    %364 = math.tanh %363 : vector<2x32xf32>
    %365 = vector.extract_strided_slice %346 {offsets = [0, 96], sizes = [2, 32], strides = [1, 1]} : vector<2x128xf32> to vector<2x32xf32>
    %cst_126 = arith.constant 5.000000e-01 : f32
    %366 = vector.broadcast %cst_126 : f32 to vector<2x32xf32>
    %367 = arith.mulf %366, %365 : vector<2x32xf32>
    %368 = math.tanh %367 : vector<2x32xf32>
    %cst_127 = arith.constant 5.000000e-01 : f32
    %369 = vector.broadcast %cst_127 : f32 to vector<2x32xf32>
    %370 = arith.mulf %369, %368 : vector<2x32xf32>
    %cst_128 = arith.constant 5.000000e-01 : f32
    %371 = vector.broadcast %cst_128 : f32 to vector<2x32xf32>
    %372 = arith.addf %370, %371 : vector<2x32xf32>
    %373 = arith.mulf %362, %340 : vector<2x32xf32>
    %374 = arith.mulf %354, %364 : vector<2x32xf32>
    %375 = arith.addf %373, %374 : vector<2x32xf32>
    %376 = math.tanh %375 : vector<2x32xf32>
    %377 = arith.mulf %372, %376 : vector<2x32xf32>
    %378 = vector.extract_strided_slice %304 {offsets = [4, 0], sizes = [2, 128], strides = [1, 1]} : vector<16x128xf32> to vector<2x128xf32>
    %379 = arith.truncf %377 : vector<2x32xf32> to vector<2x32xbf16>
    %cst_129 = arith.constant dense<0.000000e+00> : vector<2x128xf32>
    %380 = tpu.matmul %379, %305, %cst_129 {dimension_numbers = #tpu.dot_dimension_numbers<[1], [0], [0], [1], [0, 0, 1, 1], [], []>} : vector<2x32xbf16>, vector<32x128xbf16>, vector<2x128xf32> -> vector<2x128xf32>
    %381 = arith.addf %378, %380 : vector<2x128xf32>
    %382 = vector.extract_strided_slice %381 {offsets = [0, 0], sizes = [2, 32], strides = [1, 1]} : vector<2x128xf32> to vector<2x32xf32>
    %cst_130 = arith.constant 5.000000e-01 : f32
    %383 = vector.broadcast %cst_130 : f32 to vector<2x32xf32>
    %384 = arith.mulf %383, %382 : vector<2x32xf32>
    %385 = math.tanh %384 : vector<2x32xf32>
    %cst_131 = arith.constant 5.000000e-01 : f32
    %386 = vector.broadcast %cst_131 : f32 to vector<2x32xf32>
    %387 = arith.mulf %386, %385 : vector<2x32xf32>
    %cst_132 = arith.constant 5.000000e-01 : f32
    %388 = vector.broadcast %cst_132 : f32 to vector<2x32xf32>
    %389 = arith.addf %387, %388 : vector<2x32xf32>
    %390 = vector.extract_strided_slice %381 {offsets = [0, 32], sizes = [2, 32], strides = [1, 1]} : vector<2x128xf32> to vector<2x32xf32>
    %cst_133 = arith.constant 5.000000e-01 : f32
    %391 = vector.broadcast %cst_133 : f32 to vector<2x32xf32>
    %392 = arith.mulf %391, %390 : vector<2x32xf32>
    %393 = math.tanh %392 : vector<2x32xf32>
    %cst_134 = arith.constant 5.000000e-01 : f32
    %394 = vector.broadcast %cst_134 : f32 to vector<2x32xf32>
    %395 = arith.mulf %394, %393 : vector<2x32xf32>
    %cst_135 = arith.constant 5.000000e-01 : f32
    %396 = vector.broadcast %cst_135 : f32 to vector<2x32xf32>
    %397 = arith.addf %395, %396 : vector<2x32xf32>
    %398 = vector.extract_strided_slice %381 {offsets = [0, 64], sizes = [2, 32], strides = [1, 1]} : vector<2x128xf32> to vector<2x32xf32>
    %399 = math.tanh %398 : vector<2x32xf32>
    %400 = vector.extract_strided_slice %381 {offsets = [0, 96], sizes = [2, 32], strides = [1, 1]} : vector<2x128xf32> to vector<2x32xf32>
    %cst_136 = arith.constant 5.000000e-01 : f32
    %401 = vector.broadcast %cst_136 : f32 to vector<2x32xf32>
    %402 = arith.mulf %401, %400 : vector<2x32xf32>
    %403 = math.tanh %402 : vector<2x32xf32>
    %cst_137 = arith.constant 5.000000e-01 : f32
    %404 = vector.broadcast %cst_137 : f32 to vector<2x32xf32>
    %405 = arith.mulf %404, %403 : vector<2x32xf32>
    %cst_138 = arith.constant 5.000000e-01 : f32
    %406 = vector.broadcast %cst_138 : f32 to vector<2x32xf32>
    %407 = arith.addf %405, %406 : vector<2x32xf32>
    %408 = arith.mulf %397, %375 : vector<2x32xf32>
    %409 = arith.mulf %389, %399 : vector<2x32xf32>
    %410 = arith.addf %408, %409 : vector<2x32xf32>
    %411 = math.tanh %410 : vector<2x32xf32>
    %412 = arith.mulf %407, %411 : vector<2x32xf32>
    %413 = vector.extract_strided_slice %304 {offsets = [6, 0], sizes = [2, 128], strides = [1, 1]} : vector<16x128xf32> to vector<2x128xf32>
    %414 = arith.truncf %412 : vector<2x32xf32> to vector<2x32xbf16>
    %cst_139 = arith.constant dense<0.000000e+00> : vector<2x128xf32>
    %415 = tpu.matmul %414, %305, %cst_139 {dimension_numbers = #tpu.dot_dimension_numbers<[1], [0], [0], [1], [0, 0, 1, 1], [], []>} : vector<2x32xbf16>, vector<32x128xbf16>, vector<2x128xf32> -> vector<2x128xf32>
    %416 = arith.addf %413, %415 : vector<2x128xf32>
    %417 = vector.extract_strided_slice %416 {offsets = [0, 0], sizes = [2, 32], strides = [1, 1]} : vector<2x128xf32> to vector<2x32xf32>
    %cst_140 = arith.constant 5.000000e-01 : f32
    %418 = vector.broadcast %cst_140 : f32 to vector<2x32xf32>
    %419 = arith.mulf %418, %417 : vector<2x32xf32>
    %420 = math.tanh %419 : vector<2x32xf32>
    %cst_141 = arith.constant 5.000000e-01 : f32
    %421 = vector.broadcast %cst_141 : f32 to vector<2x32xf32>
    %422 = arith.mulf %421, %420 : vector<2x32xf32>
    %cst_142 = arith.constant 5.000000e-01 : f32
    %423 = vector.broadcast %cst_142 : f32 to vector<2x32xf32>
    %424 = arith.addf %422, %423 : vector<2x32xf32>
    %425 = vector.extract_strided_slice %416 {offsets = [0, 32], sizes = [2, 32], strides = [1, 1]} : vector<2x128xf32> to vector<2x32xf32>
    %cst_143 = arith.constant 5.000000e-01 : f32
    %426 = vector.broadcast %cst_143 : f32 to vector<2x32xf32>
    %427 = arith.mulf %426, %425 : vector<2x32xf32>
    %428 = math.tanh %427 : vector<2x32xf32>
    %cst_144 = arith.constant 5.000000e-01 : f32
    %429 = vector.broadcast %cst_144 : f32 to vector<2x32xf32>
    %430 = arith.mulf %429, %428 : vector<2x32xf32>
    %cst_145 = arith.constant 5.000000e-01 : f32
    %431 = vector.broadcast %cst_145 : f32 to vector<2x32xf32>
    %432 = arith.addf %430, %431 : vector<2x32xf32>
    %433 = vector.extract_strided_slice %416 {offsets = [0, 64], sizes = [2, 32], strides = [1, 1]} : vector<2x128xf32> to vector<2x32xf32>
    %434 = math.tanh %433 : vector<2x32xf32>
    %435 = vector.extract_strided_slice %416 {offsets = [0, 96], sizes = [2, 32], strides = [1, 1]} : vector<2x128xf32> to vector<2x32xf32>
    %cst_146 = arith.constant 5.000000e-01 : f32
    %436 = vector.broadcast %cst_146 : f32 to vector<2x32xf32>
    %437 = arith.mulf %436, %435 : vector<2x32xf32>
    %438 = math.tanh %437 : vector<2x32xf32>
    %cst_147 = arith.constant 5.000000e-01 : f32
    %439 = vector.broadcast %cst_147 : f32 to vector<2x32xf32>
    %440 = arith.mulf %439, %438 : vector<2x32xf32>
    %cst_148 = arith.constant 5.000000e-01 : f32
    %441 = vector.broadcast %cst_148 : f32 to vector<2x32xf32>
    %442 = arith.addf %440, %441 : vector<2x32xf32>
    %443 = arith.mulf %432, %410 : vector<2x32xf32>
    %444 = arith.mulf %424, %434 : vector<2x32xf32>
    %445 = arith.addf %443, %444 : vector<2x32xf32>
    %446 = math.tanh %445 : vector<2x32xf32>
    %447 = arith.mulf %442, %446 : vector<2x32xf32>
    %448 = vector.extract_strided_slice %304 {offsets = [8, 0], sizes = [2, 128], strides = [1, 1]} : vector<16x128xf32> to vector<2x128xf32>
    %449 = arith.truncf %447 : vector<2x32xf32> to vector<2x32xbf16>
    %cst_149 = arith.constant dense<0.000000e+00> : vector<2x128xf32>
    %450 = tpu.matmul %449, %305, %cst_149 {dimension_numbers = #tpu.dot_dimension_numbers<[1], [0], [0], [1], [0, 0, 1, 1], [], []>} : vector<2x32xbf16>, vector<32x128xbf16>, vector<2x128xf32> -> vector<2x128xf32>
    %451 = arith.addf %448, %450 : vector<2x128xf32>
    %452 = vector.extract_strided_slice %451 {offsets = [0, 0], sizes = [2, 32], strides = [1, 1]} : vector<2x128xf32> to vector<2x32xf32>
    %cst_150 = arith.constant 5.000000e-01 : f32
    %453 = vector.broadcast %cst_150 : f32 to vector<2x32xf32>
    %454 = arith.mulf %453, %452 : vector<2x32xf32>
    %455 = math.tanh %454 : vector<2x32xf32>
    %cst_151 = arith.constant 5.000000e-01 : f32
    %456 = vector.broadcast %cst_151 : f32 to vector<2x32xf32>
    %457 = arith.mulf %456, %455 : vector<2x32xf32>
    %cst_152 = arith.constant 5.000000e-01 : f32
    %458 = vector.broadcast %cst_152 : f32 to vector<2x32xf32>
    %459 = arith.addf %457, %458 : vector<2x32xf32>
    %460 = vector.extract_strided_slice %451 {offsets = [0, 32], sizes = [2, 32], strides = [1, 1]} : vector<2x128xf32> to vector<2x32xf32>
    %cst_153 = arith.constant 5.000000e-01 : f32
    %461 = vector.broadcast %cst_153 : f32 to vector<2x32xf32>
    %462 = arith.mulf %461, %460 : vector<2x32xf32>
    %463 = math.tanh %462 : vector<2x32xf32>
    %cst_154 = arith.constant 5.000000e-01 : f32
    %464 = vector.broadcast %cst_154 : f32 to vector<2x32xf32>
    %465 = arith.mulf %464, %463 : vector<2x32xf32>
    %cst_155 = arith.constant 5.000000e-01 : f32
    %466 = vector.broadcast %cst_155 : f32 to vector<2x32xf32>
    %467 = arith.addf %465, %466 : vector<2x32xf32>
    %468 = vector.extract_strided_slice %451 {offsets = [0, 64], sizes = [2, 32], strides = [1, 1]} : vector<2x128xf32> to vector<2x32xf32>
    %469 = math.tanh %468 : vector<2x32xf32>
    %470 = vector.extract_strided_slice %451 {offsets = [0, 96], sizes = [2, 32], strides = [1, 1]} : vector<2x128xf32> to vector<2x32xf32>
    %cst_156 = arith.constant 5.000000e-01 : f32
    %471 = vector.broadcast %cst_156 : f32 to vector<2x32xf32>
    %472 = arith.mulf %471, %470 : vector<2x32xf32>
    %473 = math.tanh %472 : vector<2x32xf32>
    %cst_157 = arith.constant 5.000000e-01 : f32
    %474 = vector.broadcast %cst_157 : f32 to vector<2x32xf32>
    %475 = arith.mulf %474, %473 : vector<2x32xf32>
    %cst_158 = arith.constant 5.000000e-01 : f32
    %476 = vector.broadcast %cst_158 : f32 to vector<2x32xf32>
    %477 = arith.addf %475, %476 : vector<2x32xf32>
    %478 = arith.mulf %467, %445 : vector<2x32xf32>
    %479 = arith.mulf %459, %469 : vector<2x32xf32>
    %480 = arith.addf %478, %479 : vector<2x32xf32>
    %481 = math.tanh %480 : vector<2x32xf32>
    %482 = arith.mulf %477, %481 : vector<2x32xf32>
    %483 = vector.extract_strided_slice %304 {offsets = [10, 0], sizes = [2, 128], strides = [1, 1]} : vector<16x128xf32> to vector<2x128xf32>
    %484 = arith.truncf %482 : vector<2x32xf32> to vector<2x32xbf16>
    %cst_159 = arith.constant dense<0.000000e+00> : vector<2x128xf32>
    %485 = tpu.matmul %484, %305, %cst_159 {dimension_numbers = #tpu.dot_dimension_numbers<[1], [0], [0], [1], [0, 0, 1, 1], [], []>} : vector<2x32xbf16>, vector<32x128xbf16>, vector<2x128xf32> -> vector<2x128xf32>
    %486 = arith.addf %483, %485 : vector<2x128xf32>
    %487 = vector.extract_strided_slice %486 {offsets = [0, 0], sizes = [2, 32], strides = [1, 1]} : vector<2x128xf32> to vector<2x32xf32>
    %cst_160 = arith.constant 5.000000e-01 : f32
    %488 = vector.broadcast %cst_160 : f32 to vector<2x32xf32>
    %489 = arith.mulf %488, %487 : vector<2x32xf32>
    %490 = math.tanh %489 : vector<2x32xf32>
    %cst_161 = arith.constant 5.000000e-01 : f32
    %491 = vector.broadcast %cst_161 : f32 to vector<2x32xf32>
    %492 = arith.mulf %491, %490 : vector<2x32xf32>
    %cst_162 = arith.constant 5.000000e-01 : f32
    %493 = vector.broadcast %cst_162 : f32 to vector<2x32xf32>
    %494 = arith.addf %492, %493 : vector<2x32xf32>
    %495 = vector.extract_strided_slice %486 {offsets = [0, 32], sizes = [2, 32], strides = [1, 1]} : vector<2x128xf32> to vector<2x32xf32>
    %cst_163 = arith.constant 5.000000e-01 : f32
    %496 = vector.broadcast %cst_163 : f32 to vector<2x32xf32>
    %497 = arith.mulf %496, %495 : vector<2x32xf32>
    %498 = math.tanh %497 : vector<2x32xf32>
    %cst_164 = arith.constant 5.000000e-01 : f32
    %499 = vector.broadcast %cst_164 : f32 to vector<2x32xf32>
    %500 = arith.mulf %499, %498 : vector<2x32xf32>
    %cst_165 = arith.constant 5.000000e-01 : f32
    %501 = vector.broadcast %cst_165 : f32 to vector<2x32xf32>
    %502 = arith.addf %500, %501 : vector<2x32xf32>
    %503 = vector.extract_strided_slice %486 {offsets = [0, 64], sizes = [2, 32], strides = [1, 1]} : vector<2x128xf32> to vector<2x32xf32>
    %504 = math.tanh %503 : vector<2x32xf32>
    %505 = vector.extract_strided_slice %486 {offsets = [0, 96], sizes = [2, 32], strides = [1, 1]} : vector<2x128xf32> to vector<2x32xf32>
    %cst_166 = arith.constant 5.000000e-01 : f32
    %506 = vector.broadcast %cst_166 : f32 to vector<2x32xf32>
    %507 = arith.mulf %506, %505 : vector<2x32xf32>
    %508 = math.tanh %507 : vector<2x32xf32>
    %cst_167 = arith.constant 5.000000e-01 : f32
    %509 = vector.broadcast %cst_167 : f32 to vector<2x32xf32>
    %510 = arith.mulf %509, %508 : vector<2x32xf32>
    %cst_168 = arith.constant 5.000000e-01 : f32
    %511 = vector.broadcast %cst_168 : f32 to vector<2x32xf32>
    %512 = arith.addf %510, %511 : vector<2x32xf32>
    %513 = arith.mulf %502, %480 : vector<2x32xf32>
    %514 = arith.mulf %494, %504 : vector<2x32xf32>
    %515 = arith.addf %513, %514 : vector<2x32xf32>
    %516 = math.tanh %515 : vector<2x32xf32>
    %517 = arith.mulf %512, %516 : vector<2x32xf32>
    %518 = vector.extract_strided_slice %304 {offsets = [12, 0], sizes = [2, 128], strides = [1, 1]} : vector<16x128xf32> to vector<2x128xf32>
    %519 = arith.truncf %517 : vector<2x32xf32> to vector<2x32xbf16>
    %cst_169 = arith.constant dense<0.000000e+00> : vector<2x128xf32>
    %520 = tpu.matmul %519, %305, %cst_169 {dimension_numbers = #tpu.dot_dimension_numbers<[1], [0], [0], [1], [0, 0, 1, 1], [], []>} : vector<2x32xbf16>, vector<32x128xbf16>, vector<2x128xf32> -> vector<2x128xf32>
    %521 = arith.addf %518, %520 : vector<2x128xf32>
    %522 = vector.extract_strided_slice %521 {offsets = [0, 0], sizes = [2, 32], strides = [1, 1]} : vector<2x128xf32> to vector<2x32xf32>
    %cst_170 = arith.constant 5.000000e-01 : f32
    %523 = vector.broadcast %cst_170 : f32 to vector<2x32xf32>
    %524 = arith.mulf %523, %522 : vector<2x32xf32>
    %525 = math.tanh %524 : vector<2x32xf32>
    %cst_171 = arith.constant 5.000000e-01 : f32
    %526 = vector.broadcast %cst_171 : f32 to vector<2x32xf32>
    %527 = arith.mulf %526, %525 : vector<2x32xf32>
    %cst_172 = arith.constant 5.000000e-01 : f32
    %528 = vector.broadcast %cst_172 : f32 to vector<2x32xf32>
    %529 = arith.addf %527, %528 : vector<2x32xf32>
    %530 = vector.extract_strided_slice %521 {offsets = [0, 32], sizes = [2, 32], strides = [1, 1]} : vector<2x128xf32> to vector<2x32xf32>
    %cst_173 = arith.constant 5.000000e-01 : f32
    %531 = vector.broadcast %cst_173 : f32 to vector<2x32xf32>
    %532 = arith.mulf %531, %530 : vector<2x32xf32>
    %533 = math.tanh %532 : vector<2x32xf32>
    %cst_174 = arith.constant 5.000000e-01 : f32
    %534 = vector.broadcast %cst_174 : f32 to vector<2x32xf32>
    %535 = arith.mulf %534, %533 : vector<2x32xf32>
    %cst_175 = arith.constant 5.000000e-01 : f32
    %536 = vector.broadcast %cst_175 : f32 to vector<2x32xf32>
    %537 = arith.addf %535, %536 : vector<2x32xf32>
    %538 = vector.extract_strided_slice %521 {offsets = [0, 64], sizes = [2, 32], strides = [1, 1]} : vector<2x128xf32> to vector<2x32xf32>
    %539 = math.tanh %538 : vector<2x32xf32>
    %540 = vector.extract_strided_slice %521 {offsets = [0, 96], sizes = [2, 32], strides = [1, 1]} : vector<2x128xf32> to vector<2x32xf32>
    %cst_176 = arith.constant 5.000000e-01 : f32
    %541 = vector.broadcast %cst_176 : f32 to vector<2x32xf32>
    %542 = arith.mulf %541, %540 : vector<2x32xf32>
    %543 = math.tanh %542 : vector<2x32xf32>
    %cst_177 = arith.constant 5.000000e-01 : f32
    %544 = vector.broadcast %cst_177 : f32 to vector<2x32xf32>
    %545 = arith.mulf %544, %543 : vector<2x32xf32>
    %cst_178 = arith.constant 5.000000e-01 : f32
    %546 = vector.broadcast %cst_178 : f32 to vector<2x32xf32>
    %547 = arith.addf %545, %546 : vector<2x32xf32>
    %548 = arith.mulf %537, %515 : vector<2x32xf32>
    %549 = arith.mulf %529, %539 : vector<2x32xf32>
    %550 = arith.addf %548, %549 : vector<2x32xf32>
    %551 = math.tanh %550 : vector<2x32xf32>
    %552 = arith.mulf %547, %551 : vector<2x32xf32>
    %553 = vector.extract_strided_slice %304 {offsets = [14, 0], sizes = [2, 128], strides = [1, 1]} : vector<16x128xf32> to vector<2x128xf32>
    %554 = arith.truncf %552 : vector<2x32xf32> to vector<2x32xbf16>
    %cst_179 = arith.constant dense<0.000000e+00> : vector<2x128xf32>
    %555 = tpu.matmul %554, %305, %cst_179 {dimension_numbers = #tpu.dot_dimension_numbers<[1], [0], [0], [1], [0, 0, 1, 1], [], []>} : vector<2x32xbf16>, vector<32x128xbf16>, vector<2x128xf32> -> vector<2x128xf32>
    %556 = arith.addf %553, %555 : vector<2x128xf32>
    %557 = vector.extract_strided_slice %556 {offsets = [0, 0], sizes = [2, 32], strides = [1, 1]} : vector<2x128xf32> to vector<2x32xf32>
    %cst_180 = arith.constant 5.000000e-01 : f32
    %558 = vector.broadcast %cst_180 : f32 to vector<2x32xf32>
    %559 = arith.mulf %558, %557 : vector<2x32xf32>
    %560 = math.tanh %559 : vector<2x32xf32>
    %cst_181 = arith.constant 5.000000e-01 : f32
    %561 = vector.broadcast %cst_181 : f32 to vector<2x32xf32>
    %562 = arith.mulf %561, %560 : vector<2x32xf32>
    %cst_182 = arith.constant 5.000000e-01 : f32
    %563 = vector.broadcast %cst_182 : f32 to vector<2x32xf32>
    %564 = arith.addf %562, %563 : vector<2x32xf32>
    %565 = vector.extract_strided_slice %556 {offsets = [0, 32], sizes = [2, 32], strides = [1, 1]} : vector<2x128xf32> to vector<2x32xf32>
    %cst_183 = arith.constant 5.000000e-01 : f32
    %566 = vector.broadcast %cst_183 : f32 to vector<2x32xf32>
    %567 = arith.mulf %566, %565 : vector<2x32xf32>
    %568 = math.tanh %567 : vector<2x32xf32>
    %cst_184 = arith.constant 5.000000e-01 : f32
    %569 = vector.broadcast %cst_184 : f32 to vector<2x32xf32>
    %570 = arith.mulf %569, %568 : vector<2x32xf32>
    %cst_185 = arith.constant 5.000000e-01 : f32
    %571 = vector.broadcast %cst_185 : f32 to vector<2x32xf32>
    %572 = arith.addf %570, %571 : vector<2x32xf32>
    %573 = vector.extract_strided_slice %556 {offsets = [0, 64], sizes = [2, 32], strides = [1, 1]} : vector<2x128xf32> to vector<2x32xf32>
    %574 = math.tanh %573 : vector<2x32xf32>
    %575 = vector.extract_strided_slice %556 {offsets = [0, 96], sizes = [2, 32], strides = [1, 1]} : vector<2x128xf32> to vector<2x32xf32>
    %cst_186 = arith.constant 5.000000e-01 : f32
    %576 = vector.broadcast %cst_186 : f32 to vector<2x32xf32>
    %577 = arith.mulf %576, %575 : vector<2x32xf32>
    %578 = math.tanh %577 : vector<2x32xf32>
    %cst_187 = arith.constant 5.000000e-01 : f32
    %579 = vector.broadcast %cst_187 : f32 to vector<2x32xf32>
    %580 = arith.mulf %579, %578 : vector<2x32xf32>
    %cst_188 = arith.constant 5.000000e-01 : f32
    %581 = vector.broadcast %cst_188 : f32 to vector<2x32xf32>
    %582 = arith.addf %580, %581 : vector<2x32xf32>
    %583 = arith.mulf %572, %550 : vector<2x32xf32>
    %584 = arith.mulf %564, %574 : vector<2x32xf32>
    %585 = arith.addf %583, %584 : vector<2x32xf32>
    %586 = math.tanh %585 : vector<2x32xf32>
    %587 = arith.mulf %582, %586 : vector<2x32xf32>
    %588 = arith.truncf %587 : vector<2x32xf32> to vector<2x32xbf16>
    %c0_189 = arith.constant 0 : index
    %c0_190 = arith.constant 0 : index
    %589 = vector.load %arg7[%c0_189, %c0_190] : memref<32x8xbf16, #tpu.memory_space<vmem>>, vector<32x8xbf16>
    %cst_191 = arith.constant dense<0.000000e+00> : vector<2x8xf32>
    %590 = tpu.matmul %588, %589, %cst_191 {dimension_numbers = #tpu.dot_dimension_numbers<[1], [0], [0], [1], [0, 0, 1, 1], [], []>} : vector<2x32xbf16>, vector<32x8xbf16>, vector<2x8xf32> -> vector<2x8xf32>
    %c0_192 = arith.constant 0 : index
    %c0_193 = arith.constant 0 : index
    %591 = vector.load %arg8[%c0_192, %c0_193] : memref<1x8xf32, #tpu.memory_space<vmem>>, vector<1x8xf32>
    %592 = vector.broadcast %591 : vector<1x8xf32> to vector<2x8xf32>
    %593 = arith.addf %590, %592 : vector<2x8xf32>
    %c0_194 = arith.constant 0 : index
    %c0_195 = arith.constant 0 : index
    %594 = vector.load %arg9[%c0_194, %c0_195] : memref<2x8xf32, #tpu.memory_space<vmem>>, vector<2x8xf32>
    tpu.vector_store %arg9[%c0_194, %c0_195], %593 {strides = array<i32>} : memref<2x8xf32, #tpu.memory_space<vmem>>, vector<2x8xf32>,
    return
  }
}

</mosaic_0001>

<llo_original>
// kernel: lstm_model_forward.1
$region0: #{lstm_model_forward.1}
  #allocation0 [shape = 'u32[]', space=smem, size = 0x4, offset = 0x4, fixed_abs, tag = 'smem constant byte address 0x4 - core index']
  #allocation1 [shape = 'u32[144,128]{1,0:T(1,128)}', space=vmem, size = 0x12000, scoped, tag = 'internal scratch']
  #allocation2 [shape = 'f32[16,32]{1,0:T(8,128)}', space=vmem, size = 0x2000, scoped, tag = 'scratch operand']
  %s0 = inlined_call_operand.vmem [shape: f32[16,16], index: 0, kind: input, shape index: {}]
  %s1 = inlined_call_operand.vmem [shape: bf16[16,128], index: 1, kind: input, shape index: {}]
  %s2 = inlined_call_operand.vmem [shape: bf16[32,128], index: 2, kind: input, shape index: {}]
  %s3 = inlined_call_operand.vmem [shape: f32[1,128], index: 3, kind: input, shape index: {}]
  %s4 = inlined_call_operand.vmem [shape: bf16[32,128], index: 4, kind: input, shape index: {}]
  %s5 = inlined_call_operand.vmem [shape: bf16[32,128], index: 5, kind: input, shape index: {}]
  %s6 = inlined_call_operand.vmem [shape: f32[1,128], index: 6, kind: input, shape index: {}]
  %s7 = inlined_call_operand.vmem [shape: bf16[32,8], index: 7, kind: input, shape index: {}]
  %s8 = inlined_call_operand.vmem [shape: f32[1,8], index: 8, kind: input, shape index: {}]
  %s9 = inlined_call_operand.hbm [shape: f32[2,8], index: 9, kind: output, shape index: {}]
  %s10 = sld [smem:[#allocation0]]
  $region46: #{lstm_model_forward.1} parent=0
    _
  %s12 = ssub.s32 1, %s10
  %s13 = scalar_select 0, %s12, %s10
  $region1: #{lstm_model_forward.1} parent=0
    #allocation3 [shape = 'u8[1024]{0}', space=vmem, size = 0x400, scoped, tag = 'output window, operand 0, single buffered']
    #allocation4 [shape = 's32[1]{0}', space=sflag, size = 0x4, scoped, tag = 'scoped memory for lstm_model_forward.1']
    %14 = vsyncpa [#allocation4], 0
    // Predicated region
    $region2: #{lstm_model_forward.1} parent=1 // pred_check
      _
    $region3: #{lstm_model_forward.1} parent=1 // pred_check_branch
      %16 = sbr.rel (0) target = $region5
    $region4: #{lstm_model_forward.1} parent=1 // pred_region
      _
    $region5: #{lstm_model_forward.1} parent=1 // pred_fallthru
      _
    // Predicated region
    $region6: #{lstm_model_forward.1} parent=1 // pred_check
      _
    $region7: #{lstm_model_forward.1} parent=1 // pred_check_branch
      %18 = sbr.rel (0) target = $region9
    $region8: #{lstm_model_forward.1} parent=1 // pred_region
      _
    $region9: #{lstm_model_forward.1} parent=1 // pred_fallthru
      _
    // Predicated region
    $region10: #{lstm_model_forward.1} parent=1 // pred_check
      _
    $region11: #{lstm_model_forward.1} parent=1 // pred_check_branch
      %20 = sbr.rel (0) target = $region13
    $region12: #{lstm_model_forward.1} parent=1 // pred_region
      _
    $region13: #{lstm_model_forward.1} parent=1 // pred_fallthru
      _
    // Predicated region
    $region14: #{lstm_model_forward.1} parent=1 // pred_check
      _
    $region15: #{lstm_model_forward.1} parent=1 // pred_check_branch
      %22 = sbr.rel (0) target = $region17
    $region16: #{lstm_model_forward.1} parent=1 // pred_region
      _
    $region17: #{lstm_model_forward.1} parent=1 // pred_fallthru
      _
    // Predicated region
    $region18: #{lstm_model_forward.1} parent=1 // pred_check
      _
    $region19: #{lstm_model_forward.1} parent=1 // pred_check_branch
      %24 = sbr.rel (0) target = $region21
    $region20: #{lstm_model_forward.1} parent=1 // pred_region
      _
    $region21: #{lstm_model_forward.1} parent=1 // pred_fallthru
      _
    // Predicated region
    $region22: #{lstm_model_forward.1} parent=1 // pred_check
      _
    $region23: #{lstm_model_forward.1} parent=1 // pred_check_branch
      %26 = sbr.rel (0) target = $region25
    $region24: #{lstm_model_forward.1} parent=1 // pred_region
      _
    $region25: #{lstm_model_forward.1} parent=1 // pred_fallthru
      _
    // Predicated region
    $region26: #{lstm_model_forward.1} parent=1 // pred_check
      _
    $region27: #{lstm_model_forward.1} parent=1 // pred_check_branch
      %28 = sbr.rel (0) target = $region29
    $region28: #{lstm_model_forward.1} parent=1 // pred_region
      _
    $region29: #{lstm_model_forward.1} parent=1 // pred_fallthru
      _
    // Predicated region
    $region30: #{lstm_model_forward.1} parent=1 // pred_check
      _
    $region31: #{lstm_model_forward.1} parent=1 // pred_check_branch
      %30 = sbr.rel (0) target = $region33
    $region32: #{lstm_model_forward.1} parent=1 // pred_region
      _
    $region33: #{lstm_model_forward.1} parent=1 // pred_fallthru
      _
    // Predicated region
    $region34: #{lstm_model_forward.1} parent=1 // pred_check
      _
    $region35: #{lstm_model_forward.1} parent=1 // pred_check_branch
      %32 = sbr.rel (0) target = $region37
    $region36: #{lstm_model_forward.1} parent=1 // pred_region
      _
    $region37: #{lstm_model_forward.1} parent=1 // pred_fallthru
      _
    %v34 = vld [vmem:[%s0] sm:$0xff]
    %v35 = vld [vmem:[%s0 + $0x8] sm:$0xff]
    %v36 = vpack.c.bf16 %v35, %v34
    %v37 = vld [vmem:[%s1] sm:$0xf]
    %v38 = vld [vmem:[%s1 + $0x4] sm:$0xf]
    %v39 = vld [vmem:[%s3] sm:$0x1]
    %v41 = vlaneseq
    %v42 = vshrl.u32 %v41, 7
    %v43 = vsub.s32 0, %v42
    %v44 = vrot.slane %v39, %v43
    %v48 = vunpack.c.l.b16 %v37
    %v49 = vunpack.c.l.b16 %v38
    %v50 = vpack.c.b16 %v49, %v48
    %vm52 = vcmask 130048
    %v54 = vsel %vm52, %v36, 0
    %56 = vmatprep.subr.bf16.mxu0 0
    %57 = vmatpush1.bf16.msra.mxu0 %v50
    %58 = vmatprep.subr.bf16.mxu0 0
    %59 = vmatpush1.bf16.msra.mxu0 0
    %60 = vmatprep.subr.bf16.mxu0 0
    %61 = vmatpush1.bf16.msra.mxu0 0
    %62 = vmatprep.subr.bf16.mxu0 0
    %63 = vmatpush1.bf16.msra.mxu0 0
    %64 = vmatprep.subr.bf16.mxu0 0
    %65 = vmatpush1.bf16.msra.mxu0 0
    %66 = vmatprep.subr.bf16.mxu0 0
    %67 = vmatpush1.bf16.msra.mxu0 0
    %68 = vmatprep.subr.bf16.mxu0 0
    %69 = vmatpush1.bf16.msra.mxu0 0
    %70 = vmatprep.subr.bf16.mxu0 0
    %71 = vmatpush1.bf16.msra.mxu0 0
    %72 = vmatprep.subr.bf16.mxu0 0
    %73 = vmatpush1.bf16.msra.mxu0 0
    %74 = vmatprep.subr.bf16.mxu0 0
    %75 = vmatpush1.bf16.msra.mxu0 0
    %76 = vmatprep.subr.bf16.mxu0 0
    %77 = vmatpush1.bf16.msra.mxu0 0
    %78 = vmatprep.subr.bf16.mxu0 0
    %79 = vmatpush1.bf16.msra.mxu0 0
    %80 = vmatprep.subr.bf16.mxu0 0
    %81 = vmatpush1.bf16.msra.mxu0 0
    %82 = vmatprep.subr.bf16.mxu0 0
    %83 = vmatpush1.bf16.msra.mxu0 0
    %84 = vmatprep.subr.bf16.mxu0 0
    %85 = vmatpush1.bf16.msra.mxu0 0
    %86 = vmatprep.subr.bf16.mxu0 0
    %87 = vmatpush1.bf16.msra.mxu0 0
    %88 = vmatprep.mubr.bf16.mxu0 0
    %89 = vmatmul.mubr.bf16.gmra.mrb[0].mxu0 %v54
    %v90 = vpop.f32.mrb[0].mxu0
    %v91 = vadd.f32 %v44, %v90
    %v92 = vpop.f32.mrb[0].mxu0
    %v93 = vpop.f32.mrb[0].mxu0
    %v94 = vadd.f32 %v44, %v93
    %v95 = vpop.f32.mrb[0].mxu0
    %96 = vdwg.mxu0
    %v97 = vld [vmem:[%s2] sm:$0xf]
    %v98 = vld [vmem:[%s2 + $0x4] sm:$0xf]
    %v99 = vld [vmem:[%s2 + $0x8] sm:$0xf]
    %v100 = vld [vmem:[%s2 + $0xc] sm:$0xf]
    %v105 = vunpack.c.l.b16 %v97
    %v106 = vunpack.c.l.b16 %v98
    %v107 = vunpack.c.l.b16 %v99
    %v108 = vunpack.c.l.b16 %v100
    %v109 = vpack.c.b16 %v106, %v105
    %v110 = vpack.c.b16 %v108, %v107
    %vm113 = vcmask 261120
    %v115 = vsel %vm113, 0, 0
    %117 = vmatprep.subr.bf16.mxu0 0
    %118 = vmatpush1.bf16.msra.mxu0 %v109
    %119 = vmatprep.subr.bf16.mxu0 0
    %120 = vmatpush1.bf16.msra.mxu0 %v110
    %121 = vmatprep.subr.bf16.mxu0 0
    %122 = vmatpush1.bf16.msra.mxu0 0
    %123 = vmatprep.subr.bf16.mxu0 0
    %124 = vmatpush1.bf16.msra.mxu0 0
    %125 = vmatprep.subr.bf16.mxu0 0
    %126 = vmatpush1.bf16.msra.mxu0 0
    %127 = vmatprep.subr.bf16.mxu0 0
    %128 = vmatpush1.bf16.msra.mxu0 0
    %129 = vmatprep.subr.bf16.mxu0 0
    %130 = vmatpush1.bf16.msra.mxu0 0
    %131 = vmatprep.subr.bf16.mxu0 0
    %132 = vmatpush1.bf16.msra.mxu0 0
    %133 = vmatprep.subr.bf16.mxu0 0
    %134 = vmatpush1.bf16.msra.mxu0 0
    %135 = vmatprep.subr.bf16.mxu0 0
    %136 = vmatpush1.bf16.msra.mxu0 0
    %137 = vmatprep.subr.bf16.mxu0 0
    %138 = vmatpush1.bf16.msra.mxu0 0
    %139 = vmatprep.subr.bf16.mxu0 0
    %140 = vmatpush1.bf16.msra.mxu0 0
    %141 = vmatprep.subr.bf16.mxu0 0
    %142 = vmatpush1.bf16.msra.mxu0 0
    %143 = vmatprep.subr.bf16.mxu0 0
    %144 = vmatpush1.bf16.msra.mxu0 0
    %145 = vmatprep.subr.bf16.mxu0 0
    %146 = vmatpush1.bf16.msra.mxu0 0
    %147 = vmatprep.subr.bf16.mxu0 0
    %148 = vmatpush1.bf16.msra.mxu0 0
    %149 = vmatprep.mubr.bf16.mxu0 0
    %150 = vmatmul.mubr.bf16.gmra.mrb[0].mxu0 %v115
    %v151 = vpop.f32.mrb[0].mxu0
    %v152 = vadd.f32 0.0, %v151
    %v153 = vpop.f32.mrb[0].mxu0
    %v154 = vpop.f32.mrb[0].mxu0
    %v155 = vpop.f32.mrb[0].mxu0
    %156 = vdwg.mxu0
    %v157 = vadd.f32 %v91, %v152
    %v158 = vmul.f32 %v157, 0.5
    %v159 = vtanh.pop %v158
    %v160 = vmul.f32 %v159, 0.5
    %v161 = vadd.f32 %v160, 0.5
    %v162 = vtanh.pop %v157
    %v163 = vmul.f32 %v161, 0.0
    %165 = vrot.lane.b32.xlu0 %v162, 64
    %v166 = vpop.permute.xlu0 %165
    %v168 = vmul.f32 %v161, %v166
    %170 = vrot.lane.b32.xlu0 %v168, 32
    %v171 = vpop.permute.xlu0 %170
    %v173 = vadd.f32 %v163, %v171
    %v174 = vtanh.pop %v173
    %176 = vrot.lane.b32.xlu0 %v174, 64
    %v177 = vpop.permute.xlu0 %176
    %v179 = vmul.f32 %v161, %v177
    %181 = vrot.lane.b32.xlu0 %v179, 32
    %v182 = vpop.permute.xlu0 %181
    %vm184 = vcmask 254976
    %185 = vst.msk [vmem:[#allocation2] sm:$0x3] %vm184, %v182
    %v186 = vpack.c.bf16 %v179, %v179
    %188 = vrot.lane.b32.xlu0 %v186, 32
    %v189 = vpop.permute.xlu0 %188
    %v191 = vsel %vm113, %v189, 0
    %193 = vmatprep.subr.bf16.mxu0 0
    %194 = vmatpush1.bf16.msra.mxu0 %v109
    %195 = vmatprep.subr.bf16.mxu0 0
    %196 = vmatpush1.bf16.msra.mxu0 %v110
    %197 = vmatprep.subr.bf16.mxu0 0
    %198 = vmatpush1.bf16.msra.mxu0 0
    %199 = vmatprep.subr.bf16.mxu0 0
    %200 = vmatpush1.bf16.msra.mxu0 0
    %201 = vmatprep.subr.bf16.mxu0 0
    %202 = vmatpush1.bf16.msra.mxu0 0
    %203 = vmatprep.subr.bf16.mxu0 0
    %204 = vmatpush1.bf16.msra.mxu0 0
    %205 = vmatprep.subr.bf16.mxu0 0
    %206 = vmatpush1.bf16.msra.mxu0 0
    %207 = vmatprep.subr.bf16.mxu0 0
    %208 = vmatpush1.bf16.msra.mxu0 0
    %209 = vmatprep.subr.bf16.mxu0 0
    %210 = vmatpush1.bf16.msra.mxu0 0
    %211 = vmatprep.subr.bf16.mxu0 0
    %212 = vmatpush1.bf16.msra.mxu0 0
    %213 = vmatprep.subr.bf16.mxu0 0
    %214 = vmatpush1.bf16.msra.mxu0 0
    %215 = vmatprep.subr.bf16.mxu0 0
    %216 = vmatpush1.bf16.msra.mxu0 0
    %217 = vmatprep.subr.bf16.mxu0 0
    %218 = vmatpush1.bf16.msra.mxu0 0
    %219 = vmatprep.subr.bf16.mxu0 0
    %220 = vmatpush1.bf16.msra.mxu0 0
    %221 = vmatprep.subr.bf16.mxu0 0
    %222 = vmatpush1.bf16.msra.mxu0 0
    %223 = vmatprep.subr.bf16.mxu0 0
    %224 = vmatpush1.bf16.msra.mxu0 0
    %225 = vmatprep.mubr.bf16.mxu0 0
    %226 = vmatmul.mubr.bf16.gmra.mrb[0].mxu0 %v191
    %v227 = vpop.f32.mrb[0].mxu0
    %v228 = vadd.f32 0.0, %v227
    %v229 = vpop.f32.mrb[0].mxu0
    %v230 = vpop.f32.mrb[0].mxu0
    %v231 = vpop.f32.mrb[0].mxu0
    %232 = vdwg.mxu0
    %v234 = vrot.slane %v228, 6
    %v236 = vadd.f32 %v91, %v234
    %v237 = vmul.f32 %v236, 0.5
    %v238 = vtanh.pop %v237
    %v239 = vmul.f32 %v238, 0.5
    %v240 = vadd.f32 %v239, 0.5
    %v241 = vtanh.pop %v236
    %v243 = vrot.slane %v173, 6
    %v245 = vmul.f32 %v240, %v243
    %247 = vrot.lane.b32.xlu0 %v241, 64
    %v248 = vpop.permute.xlu0 %247
    %v250 = vmul.f32 %v240, %v248
    %252 = vrot.lane.b32.xlu0 %v250, 32
    %v253 = vpop.permute.xlu0 %252
    %v255 = vadd.f32 %v245, %v253
    %v256 = vtanh.pop %v255
    %258 = vrot.lane.b32.xlu0 %v256, 64
    %v259 = vpop.permute.xlu0 %258
    %v261 = vmul.f32 %v240, %v259
    %263 = vrot.lane.b32.xlu0 %v261, 32
    %v264 = vpop.permute.xlu0 %263
    %vm266 = vcmask 257026
    %267 = vst.msk [vmem:[#allocation2] sm:$0xc] %vm266, %v264
    %v268 = vpack.c.bf16 %v261, %v261
    %v270 = vrot.slane %v268, 1
    %271 = vrot.lane.b32.xlu0 %v270, 32
    %v272 = vpop.permute.xlu0 %271
    %v274 = vsel %vm113, %v272, 0
    %276 = vmatprep.subr.bf16.mxu0 0
    %277 = vmatpush1.bf16.msra.mxu0 %v109
    %278 = vmatprep.subr.bf16.mxu0 0
    %279 = vmatpush1.bf16.msra.mxu0 %v110
    %280 = vmatprep.subr.bf16.mxu0 0
    %281 = vmatpush1.bf16.msra.mxu0 0
    %282 = vmatprep.subr.bf16.mxu0 0
    %283 = vmatpush1.bf16.msra.mxu0 0
    %284 = vmatprep.subr.bf16.mxu0 0
    %285 = vmatpush1.bf16.msra.mxu0 0
    %286 = vmatprep.subr.bf16.mxu0 0
    %287 = vmatpush1.bf16.msra.mxu0 0
    %288 = vmatprep.subr.bf16.mxu0 0
    %289 = vmatpush1.bf16.msra.mxu0 0
    %290 = vmatprep.subr.bf16.mxu0 0
    %291 = vmatpush1.bf16.msra.mxu0 0
    %292 = vmatprep.subr.bf16.mxu0 0
    %293 = vmatpush1.bf16.msra.mxu0 0
    %294 = vmatprep.subr.bf16.mxu0 0
    %295 = vmatpush1.bf16.msra.mxu0 0
    %296 = vmatprep.subr.bf16.mxu0 0
    %297 = vmatpush1.bf16.msra.mxu0 0
    %298 = vmatprep.subr.bf16.mxu0 0
    %299 = vmatpush1.bf16.msra.mxu0 0
    %300 = vmatprep.subr.bf16.mxu0 0
    %301 = vmatpush1.bf16.msra.mxu0 0
    %302 = vmatprep.subr.bf16.mxu0 0
    %303 = vmatpush1.bf16.msra.mxu0 0
    %304 = vmatprep.subr.bf16.mxu0 0
    %305 = vmatpush1.bf16.msra.mxu0 0
    %306 = vmatprep.subr.bf16.mxu0 0
    %307 = vmatpush1.bf16.msra.mxu0 0
    %308 = vmatprep.mubr.bf16.mxu0 0
    %309 = vmatmul.mubr.bf16.gmra.mrb[0].mxu0 %v274
    %v310 = vpop.f32.mrb[0].mxu0
    %v311 = vadd.f32 0.0, %v310
    %v312 = vpop.f32.mrb[0].mxu0
    %v313 = vpop.f32.mrb[0].mxu0
    %v314 = vpop.f32.mrb[0].mxu0
    %315 = vdwg.mxu0
    %v317 = vrot.slane %v311, 4
    %v319 = vadd.f32 %v91, %v317
    %v320 = vmul.f32 %v319, 0.5
    %v321 = vtanh.pop %v320
    %v322 = vmul.f32 %v321, 0.5
    %v323 = vadd.f32 %v322, 0.5
    %v324 = vtanh.pop %v319
    %v326 = vrot.slane %v255, 6
    %v328 = vmul.f32 %v323, %v326
    %330 = vrot.lane.b32.xlu0 %v324, 64
    %v331 = vpop.permute.xlu0 %330
    %v333 = vmul.f32 %v323, %v331
    %335 = vrot.lane.b32.xlu0 %v333, 32
    %v336 = vpop.permute.xlu0 %335
    %v338 = vadd.f32 %v328, %v336
    %v339 = vtanh.pop %v338
    %341 = vrot.lane.b32.xlu0 %v339, 64
    %v342 = vpop.permute.xlu0 %341
    %v344 = vmul.f32 %v323, %v342
    %346 = vrot.lane.b32.xlu0 %v344, 32
    %v347 = vpop.permute.xlu0 %346
    %vm349 = vcmask 259076
    %350 = vst.msk [vmem:[#allocation2] sm:$0x30] %vm349, %v347
    %v351 = vpack.c.bf16 %v344, %v344
    %v353 = vrot.slane %v351, 2
    %354 = vrot.lane.b32.xlu0 %v353, 32
    %v355 = vpop.permute.xlu0 %354
    %v357 = vsel %vm113, %v355, 0
    %359 = vmatprep.subr.bf16.mxu0 0
    %360 = vmatpush1.bf16.msra.mxu0 %v109
    %361 = vmatprep.subr.bf16.mxu0 0
    %362 = vmatpush1.bf16.msra.mxu0 %v110
    %363 = vmatprep.subr.bf16.mxu0 0
    %364 = vmatpush1.bf16.msra.mxu0 0
    %365 = vmatprep.subr.bf16.mxu0 0
    %366 = vmatpush1.bf16.msra.mxu0 0
    %367 = vmatprep.subr.bf16.mxu0 0
    %368 = vmatpush1.bf16.msra.mxu0 0
    %369 = vmatprep.subr.bf16.mxu0 0
    %370 = vmatpush1.bf16.msra.mxu0 0
    %371 = vmatprep.subr.bf16.mxu0 0
    %372 = vmatpush1.bf16.msra.mxu0 0
    %373 = vmatprep.subr.bf16.mxu0 0
    %374 = vmatpush1.bf16.msra.mxu0 0
    %375 = vmatprep.subr.bf16.mxu0 0
    %376 = vmatpush1.bf16.msra.mxu0 0
    %377 = vmatprep.subr.bf16.mxu0 0
    %378 = vmatpush1.bf16.msra.mxu0 0
    %379 = vmatprep.subr.bf16.mxu0 0
    %380 = vmatpush1.bf16.msra.mxu0 0
    %381 = vmatprep.subr.bf16.mxu0 0
    %382 = vmatpush1.bf16.msra.mxu0 0
    %383 = vmatprep.subr.bf16.mxu0 0
    %384 = vmatpush1.bf16.msra.mxu0 0
    %385 = vmatprep.subr.bf16.mxu0 0
    %386 = vmatpush1.bf16.msra.mxu0 0
    %387 = vmatprep.subr.bf16.mxu0 0
    %388 = vmatpush1.bf16.msra.mxu0 0
    %389 = vmatprep.subr.bf16.mxu0 0
    %390 = vmatpush1.bf16.msra.mxu0 0
    %391 = vmatprep.mubr.bf16.mxu0 0
    %392 = vmatmul.mubr.bf16.gmra.mrb[0].mxu0 %v357
    %v393 = vpop.f32.mrb[0].mxu0
    %v394 = vadd.f32 0.0, %v393
    %v395 = vpop.f32.mrb[0].mxu0
    %v396 = vpop.f32.mrb[0].mxu0
    %v397 = vpop.f32.mrb[0].mxu0
    %398 = vdwg.mxu0
    %v400 = vrot.slane %v394, 2
    %v402 = vadd.f32 %v91, %v400
    %v403 = vmul.f32 %v402, 0.5
    %v404 = vtanh.pop %v403
    %v405 = vmul.f32 %v404, 0.5
    %v406 = vadd.f32 %v405, 0.5
    %v407 = vtanh.pop %v402
    %v409 = vrot.slane %v338, 6
    %v411 = vmul.f32 %v406, %v409
    %413 = vrot.lane.b32.xlu0 %v407, 64
    %v414 = vpop.permute.xlu0 %413
    %v416 = vmul.f32 %v406, %v414
    %418 = vrot.lane.b32.xlu0 %v416, 32
    %v419 = vpop.permute.xlu0 %418
    %v421 = vadd.f32 %v411, %v419
    %v422 = vtanh.pop %v421
    %424 = vrot.lane.b32.xlu0 %v422, 64
    %v425 = vpop.permute.xlu0 %424
    %v427 = vmul.f32 %v406, %v425
    %429 = vrot.lane.b32.xlu0 %v427, 32
    %v430 = vpop.permute.xlu0 %429
    %vm432 = vcmask 261126
    %433 = vst.msk [vmem:[#allocation2] sm:$0xc0] %vm432, %v430
    %v434 = vpack.c.bf16 %v427, %v427
    %v436 = vrot.slane %v434, 3
    %437 = vrot.lane.b32.xlu0 %v436, 32
    %v438 = vpop.permute.xlu0 %437
    %v440 = vsel %vm113, %v438, 0
    %442 = vmatprep.subr.bf16.mxu0 0
    %443 = vmatpush1.bf16.msra.mxu0 %v109
    %444 = vmatprep.subr.bf16.mxu0 0
    %445 = vmatpush1.bf16.msra.mxu0 %v110
    %446 = vmatprep.subr.bf16.mxu0 0
    %447 = vmatpush1.bf16.msra.mxu0 0
    %448 = vmatprep.subr.bf16.mxu0 0
    %449 = vmatpush1.bf16.msra.mxu0 0
    %450 = vmatprep.subr.bf16.mxu0 0
    %451 = vmatpush1.bf16.msra.mxu0 0
    %452 = vmatprep.subr.bf16.mxu0 0
    %453 = vmatpush1.bf16.msra.mxu0 0
    %454 = vmatprep.subr.bf16.mxu0 0
    %455 = vmatpush1.bf16.msra.mxu0 0
    %456 = vmatprep.subr.bf16.mxu0 0
    %457 = vmatpush1.bf16.msra.mxu0 0
    %458 = vmatprep.subr.bf16.mxu0 0
    %459 = vmatpush1.bf16.msra.mxu0 0
    %460 = vmatprep.subr.bf16.mxu0 0
    %461 = vmatpush1.bf16.msra.mxu0 0
    %462 = vmatprep.subr.bf16.mxu0 0
    %463 = vmatpush1.bf16.msra.mxu0 0
    %464 = vmatprep.subr.bf16.mxu0 0
    %465 = vmatpush1.bf16.msra.mxu0 0
    %466 = vmatprep.subr.bf16.mxu0 0
    %467 = vmatpush1.bf16.msra.mxu0 0
    %468 = vmatprep.subr.bf16.mxu0 0
    %469 = vmatpush1.bf16.msra.mxu0 0
    %470 = vmatprep.subr.bf16.mxu0 0
    %471 = vmatpush1.bf16.msra.mxu0 0
    %472 = vmatprep.subr.bf16.mxu0 0
    %473 = vmatpush1.bf16.msra.mxu0 0
    %474 = vmatprep.mubr.bf16.mxu0 0
    %475 = vmatmul.mubr.bf16.gmra.mrb[0].mxu0 %v440
    %v476 = vpop.f32.mrb[0].mxu0
    %v477 = vadd.f32 0.0, %v476
    %v478 = vpop.f32.mrb[0].mxu0
    %v479 = vpop.f32.mrb[0].mxu0
    %v480 = vpop.f32.mrb[0].mxu0
    %481 = vdwg.mxu0
    %v482 = vadd.f32 %v94, %v477
    %v483 = vmul.f32 %v482, 0.5
    %v484 = vtanh.pop %v483
    %v485 = vmul.f32 %v484, 0.5
    %v486 = vadd.f32 %v485, 0.5
    %v487 = vtanh.pop %v482
    %v489 = vrot.slane %v421, 6
    %v491 = vmul.f32 %v486, %v489
    %493 = vrot.lane.b32.xlu0 %v487, 64
    %v494 = vpop.permute.xlu0 %493
    %v496 = vmul.f32 %v486, %v494
    %498 = vrot.lane.b32.xlu0 %v496, 32
    %v499 = vpop.permute.xlu0 %498
    %v501 = vadd.f32 %v491, %v499
    %v502 = vtanh.pop %v501
    %504 = vrot.lane.b32.xlu0 %v502, 64
    %v505 = vpop.permute.xlu0 %504
    %v507 = vmul.f32 %v486, %v505
    %509 = vrot.lane.b32.xlu0 %v507, 32
    %v510 = vpop.permute.xlu0 %509
    %512 = vst.msk [vmem:[#allocation2 + $0x8] sm:$0x3] %vm184, %v510
    %v513 = vpack.c.bf16 %v507, %v507
    %515 = vrot.lane.b32.xlu0 %v513, 32
    %v516 = vpop.permute.xlu0 %515
    %v518 = vsel %vm113, %v516, 0
    %520 = vmatprep.subr.bf16.mxu0 0
    %521 = vmatpush1.bf16.msra.mxu0 %v109
    %522 = vmatprep.subr.bf16.mxu0 0
    %523 = vmatpush1.bf16.msra.mxu0 %v110
    %524 = vmatprep.subr.bf16.mxu0 0
    %525 = vmatpush1.bf16.msra.mxu0 0
    %526 = vmatprep.subr.bf16.mxu0 0
    %527 = vmatpush1.bf16.msra.mxu0 0
    %528 = vmatprep.subr.bf16.mxu0 0
    %529 = vmatpush1.bf16.msra.mxu0 0
    %530 = vmatprep.subr.bf16.mxu0 0
    %531 = vmatpush1.bf16.msra.mxu0 0
    %532 = vmatprep.subr.bf16.mxu0 0
    %533 = vmatpush1.bf16.msra.mxu0 0
    %534 = vmatprep.subr.bf16.mxu0 0
    %535 = vmatpush1.bf16.msra.mxu0 0
    %536 = vmatprep.subr.bf16.mxu0 0
    %537 = vmatpush1.bf16.msra.mxu0 0
    %538 = vmatprep.subr.bf16.mxu0 0
    %539 = vmatpush1.bf16.msra.mxu0 0
    %540 = vmatprep.subr.bf16.mxu0 0
    %541 = vmatpush1.bf16.msra.mxu0 0
    %542 = vmatprep.subr.bf16.mxu0 0
    %543 = vmatpush1.bf16.msra.mxu0 0
    %544 = vmatprep.subr.bf16.mxu0 0
    %545 = vmatpush1.bf16.msra.mxu0 0
    %546 = vmatprep.subr.bf16.mxu0 0
    %547 = vmatpush1.bf16.msra.mxu0 0
    %548 = vmatprep.subr.bf16.mxu0 0
    %549 = vmatpush1.bf16.msra.mxu0 0
    %550 = vmatprep.subr.bf16.mxu0 0
    %551 = vmatpush1.bf16.msra.mxu0 0
    %552 = vmatprep.mubr.bf16.mxu0 0
    %553 = vmatmul.mubr.bf16.gmra.mrb[0].mxu0 %v518
    %v554 = vpop.f32.mrb[0].mxu0
    %v555 = vadd.f32 0.0, %v554
    %v556 = vpop.f32.mrb[0].mxu0
    %v557 = vpop.f32.mrb[0].mxu0
    %v558 = vpop.f32.mrb[0].mxu0
    %559 = vdwg.mxu0
    %v561 = vrot.slane %v555, 6
    %v563 = vadd.f32 %v94, %v561
    %v564 = vmul.f32 %v563, 0.5
    %v565 = vtanh.pop %v564
    %v566 = vmul.f32 %v565, 0.5
    %v567 = vadd.f32 %v566, 0.5
    %v568 = vtanh.pop %v563
    %v570 = vrot.slane %v501, 6
    %v572 = vmul.f32 %v567, %v570
    %574 = vrot.lane.b32.xlu0 %v568, 64
    %v575 = vpop.permute.xlu0 %574
    %v577 = vmul.f32 %v567, %v575
    %579 = vrot.lane.b32.xlu0 %v577, 32
    %v580 = vpop.permute.xlu0 %579
    %v582 = vadd.f32 %v572, %v580
    %v583 = vtanh.pop %v582
    %585 = vrot.lane.b32.xlu0 %v583, 64
    %v586 = vpop.permute.xlu0 %585
    %v588 = vmul.f32 %v567, %v586
    %590 = vrot.lane.b32.xlu0 %v588, 32
    %v591 = vpop.permute.xlu0 %590
    %593 = vst.msk [vmem:[#allocation2 + $0x8] sm:$0xc] %vm266, %v591
    %v594 = vpack.c.bf16 %v588, %v588
    %v596 = vrot.slane %v594, 1
    %597 = vrot.lane.b32.xlu0 %v596, 32
    %v598 = vpop.permute.xlu0 %597
    %v600 = vsel %vm113, %v598, 0
    %602 = vmatprep.subr.bf16.mxu0 0
    %603 = vmatpush1.bf16.msra.mxu0 %v109
    %604 = vmatprep.subr.bf16.mxu0 0
    %605 = vmatpush1.bf16.msra.mxu0 %v110
    %606 = vmatprep.subr.bf16.mxu0 0
    %607 = vmatpush1.bf16.msra.mxu0 0
    %608 = vmatprep.subr.bf16.mxu0 0
    %609 = vmatpush1.bf16.msra.mxu0 0
    %610 = vmatprep.subr.bf16.mxu0 0
    %611 = vmatpush1.bf16.msra.mxu0 0
    %612 = vmatprep.subr.bf16.mxu0 0
    %613 = vmatpush1.bf16.msra.mxu0 0
    %614 = vmatprep.subr.bf16.mxu0 0
    %615 = vmatpush1.bf16.msra.mxu0 0
    %616 = vmatprep.subr.bf16.mxu0 0
    %617 = vmatpush1.bf16.msra.mxu0 0
    %618 = vmatprep.subr.bf16.mxu0 0
    %619 = vmatpush1.bf16.msra.mxu0 0
    %620 = vmatprep.subr.bf16.mxu0 0
    %621 = vmatpush1.bf16.msra.mxu0 0
    %622 = vmatprep.subr.bf16.mxu0 0
    %623 = vmatpush1.bf16.msra.mxu0 0
    %624 = vmatprep.subr.bf16.mxu0 0
    %625 = vmatpush1.bf16.msra.mxu0 0
    %626 = vmatprep.subr.bf16.mxu0 0
    %627 = vmatpush1.bf16.msra.mxu0 0
    %628 = vmatprep.subr.bf16.mxu0 0
    %629 = vmatpush1.bf16.msra.mxu0 0
    %630 = vmatprep.subr.bf16.mxu0 0
    %631 = vmatpush1.bf16.msra.mxu0 0
    %632 = vmatprep.subr.bf16.mxu0 0
    %633 = vmatpush1.bf16.msra.mxu0 0
    %634 = vmatprep.mubr.bf16.mxu0 0
    %635 = vmatmul.mubr.bf16.gmra.mrb[0].mxu0 %v600
    %v636 = vpop.f32.mrb[0].mxu0
    %v637 = vadd.f32 0.0, %v636
    %v638 = vpop.f32.mrb[0].mxu0
    %v639 = vpop.f32.mrb[0].mxu0
    %v640 = vpop.f32.mrb[0].mxu0
    %641 = vdwg.mxu0
    %v643 = vrot.slane %v637, 4
    %v645 = vadd.f32 %v94, %v643
    %v646 = vmul.f32 %v645, 0.5
    %v647 = vtanh.pop %v646
    %v648 = vmul.f32 %v647, 0.5
    %v649 = vadd.f32 %v648, 0.5
    %v650 = vtanh.pop %v645
    %v652 = vrot.slane %v582, 6
    %v654 = vmul.f32 %v649, %v652
    %656 = vrot.lane.b32.xlu0 %v650, 64
    %v657 = vpop.permute.xlu0 %656
    %v659 = vmul.f32 %v649, %v657
    %661 = vrot.lane.b32.xlu0 %v659, 32
    %v662 = vpop.permute.xlu0 %661
    %v664 = vadd.f32 %v654, %v662
    %v665 = vtanh.pop %v664
    %667 = vrot.lane.b32.xlu0 %v665, 64
    %v668 = vpop.permute.xlu0 %667
    %v670 = vmul.f32 %v649, %v668
    %672 = vrot.lane.b32.xlu0 %v670, 32
    %v673 = vpop.permute.xlu0 %672
    %675 = vst.msk [vmem:[#allocation2 + $0x8] sm:$0x30] %vm349, %v673
    %v676 = vpack.c.bf16 %v670, %v670
    %v678 = vrot.slane %v676, 2
    %679 = vrot.lane.b32.xlu0 %v678, 32
    %v680 = vpop.permute.xlu0 %679
    %v682 = vsel %vm113, %v680, 0
    %684 = vmatprep.subr.bf16.mxu0 0
    %685 = vmatpush1.bf16.msra.mxu0 %v109
    %686 = vmatprep.subr.bf16.mxu0 0
    %687 = vmatpush1.bf16.msra.mxu0 %v110
    %688 = vmatprep.subr.bf16.mxu0 0
    %689 = vmatpush1.bf16.msra.mxu0 0
    %690 = vmatprep.subr.bf16.mxu0 0
    %691 = vmatpush1.bf16.msra.mxu0 0
    %692 = vmatprep.subr.bf16.mxu0 0
    %693 = vmatpush1.bf16.msra.mxu0 0
    %694 = vmatprep.subr.bf16.mxu0 0
    %695 = vmatpush1.bf16.msra.mxu0 0
    %696 = vmatprep.subr.bf16.mxu0 0
    %697 = vmatpush1.bf16.msra.mxu0 0
    %698 = vmatprep.subr.bf16.mxu0 0
    %699 = vmatpush1.bf16.msra.mxu0 0
    %700 = vmatprep.subr.bf16.mxu0 0
    %701 = vmatpush1.bf16.msra.mxu0 0
    %702 = vmatprep.subr.bf16.mxu0 0
    %703 = vmatpush1.bf16.msra.mxu0 0
    %704 = vmatprep.subr.bf16.mxu0 0
    %705 = vmatpush1.bf16.msra.mxu0 0
    %706 = vmatprep.subr.bf16.mxu0 0
    %707 = vmatpush1.bf16.msra.mxu0 0
    %708 = vmatprep.subr.bf16.mxu0 0
    %709 = vmatpush1.bf16.msra.mxu0 0
    %710 = vmatprep.subr.bf16.mxu0 0
    %711 = vmatpush1.bf16.msra.mxu0 0
    %712 = vmatprep.subr.bf16.mxu0 0
    %713 = vmatpush1.bf16.msra.mxu0 0
    %714 = vmatprep.subr.bf16.mxu0 0
    %715 = vmatpush1.bf16.msra.mxu0 0
    %716 = vmatprep.mubr.bf16.mxu0 0
    %717 = vmatmul.mubr.bf16.gmra.mrb[0].mxu0 %v682
    %v718 = vpop.f32.mrb[0].mxu0
    %v719 = vadd.f32 0.0, %v718
    %v720 = vpop.f32.mrb[0].mxu0
    %v721 = vpop.f32.mrb[0].mxu0
    %v722 = vpop.f32.mrb[0].mxu0
    %723 = vdwg.mxu0
    %v725 = vrot.slane %v719, 2
    %v727 = vadd.f32 %v94, %v725
    %v728 = vmul.f32 %v727, 0.5
    %v729 = vtanh.pop %v728
    %v730 = vmul.f32 %v729, 0.5
    %v731 = vadd.f32 %v730, 0.5
    %v732 = vtanh.pop %v727
    %v734 = vrot.slane %v664, 6
    %v736 = vmul.f32 %v731, %v734
    %738 = vrot.lane.b32.xlu0 %v732, 64
    %v739 = vpop.permute.xlu0 %738
    %v741 = vmul.f32 %v731, %v739
    %743 = vrot.lane.b32.xlu0 %v741, 32
    %v744 = vpop.permute.xlu0 %743
    %v746 = vadd.f32 %v736, %v744
    %v747 = vtanh.pop %v746
    %749 = vrot.lane.b32.xlu0 %v747, 64
    %v750 = vpop.permute.xlu0 %749
    %v752 = vmul.f32 %v731, %v750
    %754 = vrot.lane.b32.xlu0 %v752, 32
    %v755 = vpop.permute.xlu0 %754
    %757 = vst.msk [vmem:[#allocation2 + $0x8] sm:$0xc0] %vm432, %v755
    %v758 = vld [vmem:[#allocation2] sm:$0xff]
    %v759 = vld [vmem:[#allocation2 + $0x8] sm:$0xff]
    %v760 = vpack.c.bf16 %v759, %v758
    %v761 = vld [vmem:[%s4] sm:$0xf]
    %v762 = vld [vmem:[%s4 + $0x4] sm:$0xf]
    %v763 = vld [vmem:[%s4 + $0x8] sm:$0xf]
    %v764 = vld [vmem:[%s4 + $0xc] sm:$0xf]
    %v765 = vld [vmem:[%s6] sm:$0x1]
    %v767 = vlaneseq
    %v768 = vshrl.u32 %v767, 7
    %v769 = vsub.s32 0, %v768
    %v770 = vrot.slane %v765, %v769
    %v776 = vunpack.c.l.b16 %v761
    %v777 = vunpack.c.l.b16 %v762
    %v778 = vunpack.c.l.b16 %v763
    %v779 = vunpack.c.l.b16 %v764
    %v780 = vpack.c.b16 %v777, %v776
    %v781 = vpack.c.b16 %v779, %v778
    %v785 = vsel %vm113, %v760, 0
    %787 = vmatprep.subr.bf16.mxu0 0
    %788 = vmatpush1.bf16.msra.mxu0 %v780
    %789 = vmatprep.subr.bf16.mxu0 0
    %790 = vmatpush1.bf16.msra.mxu0 %v781
    %791 = vmatprep.subr.bf16.mxu0 0
    %792 = vmatpush1.bf16.msra.mxu0 0
    %793 = vmatprep.subr.bf16.mxu0 0
    %794 = vmatpush1.bf16.msra.mxu0 0
    %795 = vmatprep.subr.bf16.mxu0 0
    %796 = vmatpush1.bf16.msra.mxu0 0
    %797 = vmatprep.subr.bf16.mxu0 0
    %798 = vmatpush1.bf16.msra.mxu0 0
    %799 = vmatprep.subr.bf16.mxu0 0
    %800 = vmatpush1.bf16.msra.mxu0 0
    %801 = vmatprep.subr.bf16.mxu0 0
    %802 = vmatpush1.bf16.msra.mxu0 0
    %803 = vmatprep.subr.bf16.mxu0 0
    %804 = vmatpush1.bf16.msra.mxu0 0
    %805 = vmatprep.subr.bf16.mxu0 0
    %806 = vmatpush1.bf16.msra.mxu0 0
    %807 = vmatprep.subr.bf16.mxu0 0
    %808 = vmatpush1.bf16.msra.mxu0 0
    %809 = vmatprep.subr.bf16.mxu0 0
    %810 = vmatpush1.bf16.msra.mxu0 0
    %811 = vmatprep.subr.bf16.mxu0 0
    %812 = vmatpush1.bf16.msra.mxu0 0
    %813 = vmatprep.subr.bf16.mxu0 0
    %814 = vmatpush1.bf16.msra.mxu0 0
    %815 = vmatprep.subr.bf16.mxu0 0
    %816 = vmatpush1.bf16.msra.mxu0 0
    %817 = vmatprep.subr.bf16.mxu0 0
    %818 = vmatpush1.bf16.msra.mxu0 0
    %819 = vmatprep.mubr.bf16.mxu0 0
    %820 = vmatmul.mubr.bf16.gmra.mrb[0].mxu0 %v785
    %v821 = vpop.f32.mrb[0].mxu0
    %v822 = vadd.f32 %v770, %v821
    %v823 = vpop.f32.mrb[0].mxu0
    %v824 = vpop.f32.mrb[0].mxu0
    %v825 = vadd.f32 %v770, %v824
    %v826 = vpop.f32.mrb[0].mxu0
    %827 = vdwg.mxu0
    %v828 = vld [vmem:[%s5] sm:$0xf]
    %v829 = vld [vmem:[%s5 + $0x4] sm:$0xf]
    %v830 = vld [vmem:[%s5 + $0x8] sm:$0xf]
    %v831 = vld [vmem:[%s5 + $0xc] sm:$0xf]
    %v836 = vunpack.c.l.b16 %v828
    %v837 = vunpack.c.l.b16 %v829
    %v838 = vunpack.c.l.b16 %v830
    %v839 = vunpack.c.l.b16 %v831
    %v840 = vpack.c.b16 %v837, %v836
    %v841 = vpack.c.b16 %v839, %v838
    %844 = vmatprep.subr.bf16.mxu0 0
    %845 = vmatpush1.bf16.msra.mxu0 %v840
    %846 = vmatprep.subr.bf16.mxu0 0
    %847 = vmatpush1.bf16.msra.mxu0 %v841
    %848 = vmatprep.subr.bf16.mxu0 0
    %849 = vmatpush1.bf16.msra.mxu0 0
    %850 = vmatprep.subr.bf16.mxu0 0
    %851 = vmatpush1.bf16.msra.mxu0 0
    %852 = vmatprep.subr.bf16.mxu0 0
    %853 = vmatpush1.bf16.msra.mxu0 0
    %854 = vmatprep.subr.bf16.mxu0 0
    %855 = vmatpush1.bf16.msra.mxu0 0
    %856 = vmatprep.subr.bf16.mxu0 0
    %857 = vmatpush1.bf16.msra.mxu0 0
    %858 = vmatprep.subr.bf16.mxu0 0
    %859 = vmatpush1.bf16.msra.mxu0 0
    %860 = vmatprep.subr.bf16.mxu0 0
    %861 = vmatpush1.bf16.msra.mxu0 0
    %862 = vmatprep.subr.bf16.mxu0 0
    %863 = vmatpush1.bf16.msra.mxu0 0
    %864 = vmatprep.subr.bf16.mxu0 0
    %865 = vmatpush1.bf16.msra.mxu0 0
    %866 = vmatprep.subr.bf16.mxu0 0
    %867 = vmatpush1.bf16.msra.mxu0 0
    %868 = vmatprep.subr.bf16.mxu0 0
    %869 = vmatpush1.bf16.msra.mxu0 0
    %870 = vmatprep.subr.bf16.mxu0 0
    %871 = vmatpush1.bf16.msra.mxu0 0
    %872 = vmatprep.subr.bf16.mxu0 0
    %873 = vmatpush1.bf16.msra.mxu0 0
    %874 = vmatprep.subr.bf16.mxu0 0
    %875 = vmatpush1.bf16.msra.mxu0 0
    %876 = vmatprep.mubr.bf16.mxu0 0
    %877 = vmatmul.mubr.bf16.gmra.mrb[0].mxu0 %v115
    %v878 = vpop.f32.mrb[0].mxu0
    %v879 = vadd.f32 0.0, %v878
    %v880 = vpop.f32.mrb[0].mxu0
    %v881 = vpop.f32.mrb[0].mxu0
    %v882 = vpop.f32.mrb[0].mxu0
    %883 = vdwg.mxu0
    %v884 = vadd.f32 %v822, %v879
    %v885 = vmul.f32 %v884, 0.5
    %v886 = vtanh.pop %v885
    %v887 = vmul.f32 %v886, 0.5
    %v888 = vadd.f32 %v887, 0.5
    %v889 = vtanh.pop %v884
    %v890 = vmul.f32 %v888, 0.0
    %892 = vrot.lane.b32.xlu0 %v889, 64
    %v893 = vpop.permute.xlu0 %892
    %v895 = vmul.f32 %v888, %v893
    %897 = vrot.lane.b32.xlu0 %v895, 32
    %v898 = vpop.permute.xlu0 %897
    %v900 = vadd.f32 %v890, %v898
    %v901 = vtanh.pop %v900
    %903 = vrot.lane.b32.xlu0 %v901, 64
    %v904 = vpop.permute.xlu0 %903
    %v906 = vmul.f32 %v888, %v904
    %v907 = vpack.c.bf16 %v906, %v906
    %909 = vrot.lane.b32.xlu0 %v907, 32
    %v910 = vpop.permute.xlu0 %909
    %v912 = vsel %vm113, %v910, 0
    %914 = vmatprep.subr.bf16.mxu0 0
    %915 = vmatpush1.bf16.msra.mxu0 %v840
    %916 = vmatprep.subr.bf16.mxu0 0
    %917 = vmatpush1.bf16.msra.mxu0 %v841
    %918 = vmatprep.subr.bf16.mxu0 0
    %919 = vmatpush1.bf16.msra.mxu0 0
    %920 = vmatprep.subr.bf16.mxu0 0
    %921 = vmatpush1.bf16.msra.mxu0 0
    %922 = vmatprep.subr.bf16.mxu0 0
    %923 = vmatpush1.bf16.msra.mxu0 0
    %924 = vmatprep.subr.bf16.mxu0 0
    %925 = vmatpush1.bf16.msra.mxu0 0
    %926 = vmatprep.subr.bf16.mxu0 0
    %927 = vmatpush1.bf16.msra.mxu0 0
    %928 = vmatprep.subr.bf16.mxu0 0
    %929 = vmatpush1.bf16.msra.mxu0 0
    %930 = vmatprep.subr.bf16.mxu0 0
    %931 = vmatpush1.bf16.msra.mxu0 0
    %932 = vmatprep.subr.bf16.mxu0 0
    %933 = vmatpush1.bf16.msra.mxu0 0
    %934 = vmatprep.subr.bf16.mxu0 0
    %935 = vmatpush1.bf16.msra.mxu0 0
    %936 = vmatprep.subr.bf16.mxu0 0
    %937 = vmatpush1.bf16.msra.mxu0 0
    %938 = vmatprep.subr.bf16.mxu0 0
    %939 = vmatpush1.bf16.msra.mxu0 0
    %940 = vmatprep.subr.bf16.mxu0 0
    %941 = vmatpush1.bf16.msra.mxu0 0
    %942 = vmatprep.subr.bf16.mxu0 0
    %943 = vmatpush1.bf16.msra.mxu0 0
    %944 = vmatprep.subr.bf16.mxu0 0
    %945 = vmatpush1.bf16.msra.mxu0 0
    %946 = vmatprep.mubr.bf16.mxu0 0
    %947 = vmatmul.mubr.bf16.gmra.mrb[0].mxu0 %v912
    %v948 = vpop.f32.mrb[0].mxu0
    %v949 = vadd.f32 0.0, %v948
    %v950 = vpop.f32.mrb[0].mxu0
    %v951 = vpop.f32.mrb[0].mxu0
    %v952 = vpop.f32.mrb[0].mxu0
    %953 = vdwg.mxu0
    %v955 = vrot.slane %v949, 6
    %v957 = vadd.f32 %v822, %v955
    %v958 = vmul.f32 %v957, 0.5
    %v959 = vtanh.pop %v958
    %v960 = vmul.f32 %v959, 0.5
    %v961 = vadd.f32 %v960, 0.5
    %v962 = vtanh.pop %v957
    %v964 = vrot.slane %v900, 6
    %v966 = vmul.f32 %v961, %v964
    %968 = vrot.lane.b32.xlu0 %v962, 64
    %v969 = vpop.permute.xlu0 %968
    %v971 = vmul.f32 %v961, %v969
    %973 = vrot.lane.b32.xlu0 %v971, 32
    %v974 = vpop.permute.xlu0 %973
    %v976 = vadd.f32 %v966, %v974
    %v977 = vtanh.pop %v976
    %979 = vrot.lane.b32.xlu0 %v977, 64
    %v980 = vpop.permute.xlu0 %979
    %v982 = vmul.f32 %v961, %v980
    %v983 = vpack.c.bf16 %v982, %v982
    %v985 = vrot.slane %v983, 1
    %986 = vrot.lane.b32.xlu0 %v985, 32
    %v987 = vpop.permute.xlu0 %986
    %v989 = vsel %vm113, %v987, 0
    %991 = vmatprep.subr.bf16.mxu0 0
    %992 = vmatpush1.bf16.msra.mxu0 %v840
    %993 = vmatprep.subr.bf16.mxu0 0
    %994 = vmatpush1.bf16.msra.mxu0 %v841
    %995 = vmatprep.subr.bf16.mxu0 0
    %996 = vmatpush1.bf16.msra.mxu0 0
    %997 = vmatprep.subr.bf16.mxu0 0
    %998 = vmatpush1.bf16.msra.mxu0 0
    %999 = vmatprep.subr.bf16.mxu0 0
    %1000 = vmatpush1.bf16.msra.mxu0 0
    %1001 = vmatprep.subr.bf16.mxu0 0
    %1002 = vmatpush1.bf16.msra.mxu0 0
    %1003 = vmatprep.subr.bf16.mxu0 0
    %1004 = vmatpush1.bf16.msra.mxu0 0
    %1005 = vmatprep.subr.bf16.mxu0 0
    %1006 = vmatpush1.bf16.msra.mxu0 0
    %1007 = vmatprep.subr.bf16.mxu0 0
    %1008 = vmatpush1.bf16.msra.mxu0 0
    %1009 = vmatprep.subr.bf16.mxu0 0
    %1010 = vmatpush1.bf16.msra.mxu0 0
    %1011 = vmatprep.subr.bf16.mxu0 0
    %1012 = vmatpush1.bf16.msra.mxu0 0
    %1013 = vmatprep.subr.bf16.mxu0 0
    %1014 = vmatpush1.bf16.msra.mxu0 0
    %1015 = vmatprep.subr.bf16.mxu0 0
    %1016 = vmatpush1.bf16.msra.mxu0 0
    %1017 = vmatprep.subr.bf16.mxu0 0
    %1018 = vmatpush1.bf16.msra.mxu0 0
    %1019 = vmatprep.subr.bf16.mxu0 0
    %1020 = vmatpush1.bf16.msra.mxu0 0
    %1021 = vmatprep.subr.bf16.mxu0 0
    %1022 = vmatpush1.bf16.msra.mxu0 0
    %1023 = vmatprep.mubr.bf16.mxu0 0
    %1024 = vmatmul.mubr.bf16.gmra.mrb[0].mxu0 %v989
    %v1025 = vpop.f32.mrb[0].mxu0
    %v1026 = vadd.f32 0.0, %v1025
    %v1027 = vpop.f32.mrb[0].mxu0
    %v1028 = vpop.f32.mrb[0].mxu0
    %v1029 = vpop.f32.mrb[0].mxu0
    %1030 = vdwg.mxu0
    %v1032 = vrot.slane %v1026, 4
    %v1034 = vadd.f32 %v822, %v1032
    %v1035 = vmul.f32 %v1034, 0.5
    %v1036 = vtanh.pop %v1035
    %v1037 = vmul.f32 %v1036, 0.5
    %v1038 = vadd.f32 %v1037, 0.5
    %v1039 = vtanh.pop %v1034
    %v1041 = vrot.slane %v976, 6
    %v1043 = vmul.f32 %v1038, %v1041
    %1045 = vrot.lane.b32.xlu0 %v1039, 64
    %v1046 = vpop.permute.xlu0 %1045
    %v1048 = vmul.f32 %v1038, %v1046
    %1050 = vrot.lane.b32.xlu0 %v1048, 32
    %v1051 = vpop.permute.xlu0 %1050
    %v1053 = vadd.f32 %v1043, %v1051
    %v1054 = vtanh.pop %v1053
    %1056 = vrot.lane.b32.xlu0 %v1054, 64
    %v1057 = vpop.permute.xlu0 %1056
    %v1059 = vmul.f32 %v1038, %v1057
    %v1060 = vpack.c.bf16 %v1059, %v1059
    %v1062 = vrot.slane %v1060, 2
    %1063 = vrot.lane.b32.xlu0 %v1062, 32
    %v1064 = vpop.permute.xlu0 %1063
    %v1066 = vsel %vm113, %v1064, 0
    %1068 = vmatprep.subr.bf16.mxu0 0
    %1069 = vmatpush1.bf16.msra.mxu0 %v840
    %1070 = vmatprep.subr.bf16.mxu0 0
    %1071 = vmatpush1.bf16.msra.mxu0 %v841
    %1072 = vmatprep.subr.bf16.mxu0 0
    %1073 = vmatpush1.bf16.msra.mxu0 0
    %1074 = vmatprep.subr.bf16.mxu0 0
    %1075 = vmatpush1.bf16.msra.mxu0 0
    %1076 = vmatprep.subr.bf16.mxu0 0
    %1077 = vmatpush1.bf16.msra.mxu0 0
    %1078 = vmatprep.subr.bf16.mxu0 0
    %1079 = vmatpush1.bf16.msra.mxu0 0
    %1080 = vmatprep.subr.bf16.mxu0 0
    %1081 = vmatpush1.bf16.msra.mxu0 0
    %1082 = vmatprep.subr.bf16.mxu0 0
    %1083 = vmatpush1.bf16.msra.mxu0 0
    %1084 = vmatprep.subr.bf16.mxu0 0
    %1085 = vmatpush1.bf16.msra.mxu0 0
    %1086 = vmatprep.subr.bf16.mxu0 0
    %1087 = vmatpush1.bf16.msra.mxu0 0
    %1088 = vmatprep.subr.bf16.mxu0 0
    %1089 = vmatpush1.bf16.msra.mxu0 0
    %1090 = vmatprep.subr.bf16.mxu0 0
    %1091 = vmatpush1.bf16.msra.mxu0 0
    %1092 = vmatprep.subr.bf16.mxu0 0
    %1093 = vmatpush1.bf16.msra.mxu0 0
    %1094 = vmatprep.subr.bf16.mxu0 0
    %1095 = vmatpush1.bf16.msra.mxu0 0
    %1096 = vmatprep.subr.bf16.mxu0 0
    %1097 = vmatpush1.bf16.msra.mxu0 0
    %1098 = vmatprep.subr.bf16.mxu0 0
    %1099 = vmatpush1.bf16.msra.mxu0 0
    %1100 = vmatprep.mubr.bf16.mxu0 0
    %1101 = vmatmul.mubr.bf16.gmra.mrb[0].mxu0 %v1066
    %v1102 = vpop.f32.mrb[0].mxu0
    %v1103 = vadd.f32 0.0, %v1102
    %v1104 = vpop.f32.mrb[0].mxu0
    %v1105 = vpop.f32.mrb[0].mxu0
    %v1106 = vpop.f32.mrb[0].mxu0
    %1107 = vdwg.mxu0
    %v1109 = vrot.slane %v1103, 2
    %v1111 = vadd.f32 %v822, %v1109
    %v1112 = vmul.f32 %v1111, 0.5
    %v1113 = vtanh.pop %v1112
    %v1114 = vmul.f32 %v1113, 0.5
    %v1115 = vadd.f32 %v1114, 0.5
    %v1116 = vtanh.pop %v1111
    %v1118 = vrot.slane %v1053, 6
    %v1120 = vmul.f32 %v1115, %v1118
    %1122 = vrot.lane.b32.xlu0 %v1116, 64
    %v1123 = vpop.permute.xlu0 %1122
    %v1125 = vmul.f32 %v1115, %v1123
    %1127 = vrot.lane.b32.xlu0 %v1125, 32
    %v1128 = vpop.permute.xlu0 %1127
    %v1130 = vadd.f32 %v1120, %v1128
    %v1131 = vtanh.pop %v1130
    %1133 = vrot.lane.b32.xlu0 %v1131, 64
    %v1134 = vpop.permute.xlu0 %1133
    %v1136 = vmul.f32 %v1115, %v1134
    %v1137 = vpack.c.bf16 %v1136, %v1136
    %v1139 = vrot.slane %v1137, 3
    %1140 = vrot.lane.b32.xlu0 %v1139, 32
    %v1141 = vpop.permute.xlu0 %1140
    %v1143 = vsel %vm113, %v1141, 0
    %1145 = vmatprep.subr.bf16.mxu0 0
    %1146 = vmatpush1.bf16.msra.mxu0 %v840
    %1147 = vmatprep.subr.bf16.mxu0 0
    %1148 = vmatpush1.bf16.msra.mxu0 %v841
    %1149 = vmatprep.subr.bf16.mxu0 0
    %1150 = vmatpush1.bf16.msra.mxu0 0
    %1151 = vmatprep.subr.bf16.mxu0 0
    %1152 = vmatpush1.bf16.msra.mxu0 0
    %1153 = vmatprep.subr.bf16.mxu0 0
    %1154 = vmatpush1.bf16.msra.mxu0 0
    %1155 = vmatprep.subr.bf16.mxu0 0
    %1156 = vmatpush1.bf16.msra.mxu0 0
    %1157 = vmatprep.subr.bf16.mxu0 0
    %1158 = vmatpush1.bf16.msra.mxu0 0
    %1159 = vmatprep.subr.bf16.mxu0 0
    %1160 = vmatpush1.bf16.msra.mxu0 0
    %1161 = vmatprep.subr.bf16.mxu0 0
    %1162 = vmatpush1.bf16.msra.mxu0 0
    %1163 = vmatprep.subr.bf16.mxu0 0
    %1164 = vmatpush1.bf16.msra.mxu0 0
    %1165 = vmatprep.subr.bf16.mxu0 0
    %1166 = vmatpush1.bf16.msra.mxu0 0
    %1167 = vmatprep.subr.bf16.mxu0 0
    %1168 = vmatpush1.bf16.msra.mxu0 0
    %1169 = vmatprep.subr.bf16.mxu0 0
    %1170 = vmatpush1.bf16.msra.mxu0 0
    %1171 = vmatprep.subr.bf16.mxu0 0
    %1172 = vmatpush1.bf16.msra.mxu0 0
    %1173 = vmatprep.subr.bf16.mxu0 0
    %1174 = vmatpush1.bf16.msra.mxu0 0
    %1175 = vmatprep.subr.bf16.mxu0 0
    %1176 = vmatpush1.bf16.msra.mxu0 0
    %1177 = vmatprep.mubr.bf16.mxu0 0
    %1178 = vmatmul.mubr.bf16.gmra.mrb[0].mxu0 %v1143
    %v1179 = vpop.f32.mrb[0].mxu0
    %v1180 = vadd.f32 0.0, %v1179
    %v1181 = vpop.f32.mrb[0].mxu0
    %v1182 = vpop.f32.mrb[0].mxu0
    %v1183 = vpop.f32.mrb[0].mxu0
    %1184 = vdwg.mxu0
    %v1185 = vadd.f32 %v825, %v1180
    %v1186 = vmul.f32 %v1185, 0.5
    %v1187 = vtanh.pop %v1186
    %v1188 = vmul.f32 %v1187, 0.5
    %v1189 = vadd.f32 %v1188, 0.5
    %v1190 = vtanh.pop %v1185
    %v1192 = vrot.slane %v1130, 6
    %v1194 = vmul.f32 %v1189, %v1192
    %1196 = vrot.lane.b32.xlu0 %v1190, 64
    %v1197 = vpop.permute.xlu0 %1196
    %v1199 = vmul.f32 %v1189, %v1197
    %1201 = vrot.lane.b32.xlu0 %v1199, 32
    %v1202 = vpop.permute.xlu0 %1201
    %v1204 = vadd.f32 %v1194, %v1202
    %v1205 = vtanh.pop %v1204
    %1207 = vrot.lane.b32.xlu0 %v1205, 64
    %v1208 = vpop.permute.xlu0 %1207
    %v1210 = vmul.f32 %v1189, %v1208
    %v1211 = vpack.c.bf16 %v1210, %v1210
    %1213 = vrot.lane.b32.xlu0 %v1211, 32
    %v1214 = vpop.permute.xlu0 %1213
    %v1216 = vsel %vm113, %v1214, 0
    %1218 = vmatprep.subr.bf16.mxu0 0
    %1219 = vmatpush1.bf16.msra.mxu0 %v840
    %1220 = vmatprep.subr.bf16.mxu0 0
    %1221 = vmatpush1.bf16.msra.mxu0 %v841
    %1222 = vmatprep.subr.bf16.mxu0 0
    %1223 = vmatpush1.bf16.msra.mxu0 0
    %1224 = vmatprep.subr.bf16.mxu0 0
    %1225 = vmatpush1.bf16.msra.mxu0 0
    %1226 = vmatprep.subr.bf16.mxu0 0
    %1227 = vmatpush1.bf16.msra.mxu0 0
    %1228 = vmatprep.subr.bf16.mxu0 0
    %1229 = vmatpush1.bf16.msra.mxu0 0
    %1230 = vmatprep.subr.bf16.mxu0 0
    %1231 = vmatpush1.bf16.msra.mxu0 0
    %1232 = vmatprep.subr.bf16.mxu0 0
    %1233 = vmatpush1.bf16.msra.mxu0 0
    %1234 = vmatprep.subr.bf16.mxu0 0
    %1235 = vmatpush1.bf16.msra.mxu0 0
    %1236 = vmatprep.subr.bf16.mxu0 0
    %1237 = vmatpush1.bf16.msra.mxu0 0
    %1238 = vmatprep.subr.bf16.mxu0 0
    %1239 = vmatpush1.bf16.msra.mxu0 0
    %1240 = vmatprep.subr.bf16.mxu0 0
    %1241 = vmatpush1.bf16.msra.mxu0 0
    %1242 = vmatprep.subr.bf16.mxu0 0
    %1243 = vmatpush1.bf16.msra.mxu0 0
    %1244 = vmatprep.subr.bf16.mxu0 0
    %1245 = vmatpush1.bf16.msra.mxu0 0
    %1246 = vmatprep.subr.bf16.mxu0 0
    %1247 = vmatpush1.bf16.msra.mxu0 0
    %1248 = vmatprep.subr.bf16.mxu0 0
    %1249 = vmatpush1.bf16.msra.mxu0 0
    %1250 = vmatprep.mubr.bf16.mxu0 0
    %1251 = vmatmul.mubr.bf16.gmra.mrb[0].mxu0 %v1216
    %v1252 = vpop.f32.mrb[0].mxu0
    %v1253 = vadd.f32 0.0, %v1252
    %v1254 = vpop.f32.mrb[0].mxu0
    %v1255 = vpop.f32.mrb[0].mxu0
    %v1256 = vpop.f32.mrb[0].mxu0
    %1257 = vdwg.mxu0
    %v1259 = vrot.slane %v1253, 6
    %v1261 = vadd.f32 %v825, %v1259
    %v1262 = vmul.f32 %v1261, 0.5
    %v1263 = vtanh.pop %v1262
    %v1264 = vmul.f32 %v1263, 0.5
    %v1265 = vadd.f32 %v1264, 0.5
    %v1266 = vtanh.pop %v1261
    %v1268 = vrot.slane %v1204, 6
    %v1270 = vmul.f32 %v1265, %v1268
    %1272 = vrot.lane.b32.xlu0 %v1266, 64
    %v1273 = vpop.permute.xlu0 %1272
    %v1275 = vmul.f32 %v1265, %v1273
    %1277 = vrot.lane.b32.xlu0 %v1275, 32
    %v1278 = vpop.permute.xlu0 %1277
    %v1280 = vadd.f32 %v1270, %v1278
    %v1281 = vtanh.pop %v1280
    %1283 = vrot.lane.b32.xlu0 %v1281, 64
    %v1284 = vpop.permute.xlu0 %1283
    %v1286 = vmul.f32 %v1265, %v1284
    %v1287 = vpack.c.bf16 %v1286, %v1286
    %v1289 = vrot.slane %v1287, 1
    %1290 = vrot.lane.b32.xlu0 %v1289, 32
    %v1291 = vpop.permute.xlu0 %1290
    %v1293 = vsel %vm113, %v1291, 0
    %1295 = vmatprep.subr.bf16.mxu0 0
    %1296 = vmatpush1.bf16.msra.mxu0 %v840
    %1297 = vmatprep.subr.bf16.mxu0 0
    %1298 = vmatpush1.bf16.msra.mxu0 %v841
    %1299 = vmatprep.subr.bf16.mxu0 0
    %1300 = vmatpush1.bf16.msra.mxu0 0
    %1301 = vmatprep.subr.bf16.mxu0 0
    %1302 = vmatpush1.bf16.msra.mxu0 0
    %1303 = vmatprep.subr.bf16.mxu0 0
    %1304 = vmatpush1.bf16.msra.mxu0 0
    %1305 = vmatprep.subr.bf16.mxu0 0
    %1306 = vmatpush1.bf16.msra.mxu0 0
    %1307 = vmatprep.subr.bf16.mxu0 0
    %1308 = vmatpush1.bf16.msra.mxu0 0
    %1309 = vmatprep.subr.bf16.mxu0 0
    %1310 = vmatpush1.bf16.msra.mxu0 0
    %1311 = vmatprep.subr.bf16.mxu0 0
    %1312 = vmatpush1.bf16.msra.mxu0 0
    %1313 = vmatprep.subr.bf16.mxu0 0
    %1314 = vmatpush1.bf16.msra.mxu0 0
    %1315 = vmatprep.subr.bf16.mxu0 0
    %1316 = vmatpush1.bf16.msra.mxu0 0
    %1317 = vmatprep.subr.bf16.mxu0 0
    %1318 = vmatpush1.bf16.msra.mxu0 0
    %1319 = vmatprep.subr.bf16.mxu0 0
    %1320 = vmatpush1.bf16.msra.mxu0 0
    %1321 = vmatprep.subr.bf16.mxu0 0
    %1322 = vmatpush1.bf16.msra.mxu0 0
    %1323 = vmatprep.subr.bf16.mxu0 0
    %1324 = vmatpush1.bf16.msra.mxu0 0
    %1325 = vmatprep.subr.bf16.mxu0 0
    %1326 = vmatpush1.bf16.msra.mxu0 0
    %1327 = vmatprep.mubr.bf16.mxu0 0
    %1328 = vmatmul.mubr.bf16.gmra.mrb[0].mxu0 %v1293
    %v1329 = vpop.f32.mrb[0].mxu0
    %v1330 = vadd.f32 0.0, %v1329
    %v1331 = vpop.f32.mrb[0].mxu0
    %v1332 = vpop.f32.mrb[0].mxu0
    %v1333 = vpop.f32.mrb[0].mxu0
    %1334 = vdwg.mxu0
    %v1336 = vrot.slane %v1330, 4
    %v1338 = vadd.f32 %v825, %v1336
    %v1339 = vmul.f32 %v1338, 0.5
    %v1340 = vtanh.pop %v1339
    %v1341 = vmul.f32 %v1340, 0.5
    %v1342 = vadd.f32 %v1341, 0.5
    %v1343 = vtanh.pop %v1338
    %v1345 = vrot.slane %v1280, 6
    %v1347 = vmul.f32 %v1342, %v1345
    %1349 = vrot.lane.b32.xlu0 %v1343, 64
    %v1350 = vpop.permute.xlu0 %1349
    %v1352 = vmul.f32 %v1342, %v1350
    %1354 = vrot.lane.b32.xlu0 %v1352, 32
    %v1355 = vpop.permute.xlu0 %1354
    %v1357 = vadd.f32 %v1347, %v1355
    %v1358 = vtanh.pop %v1357
    %1360 = vrot.lane.b32.xlu0 %v1358, 64
    %v1361 = vpop.permute.xlu0 %1360
    %v1363 = vmul.f32 %v1342, %v1361
    %v1364 = vpack.c.bf16 %v1363, %v1363
    %v1366 = vrot.slane %v1364, 2
    %1367 = vrot.lane.b32.xlu0 %v1366, 32
    %v1368 = vpop.permute.xlu0 %1367
    %v1370 = vsel %vm113, %v1368, 0
    %1372 = vmatprep.subr.bf16.mxu0 0
    %1373 = vmatpush1.bf16.msra.mxu0 %v840
    %1374 = vmatprep.subr.bf16.mxu0 0
    %1375 = vmatpush1.bf16.msra.mxu0 %v841
    %1376 = vmatprep.subr.bf16.mxu0 0
    %1377 = vmatpush1.bf16.msra.mxu0 0
    %1378 = vmatprep.subr.bf16.mxu0 0
    %1379 = vmatpush1.bf16.msra.mxu0 0
    %1380 = vmatprep.subr.bf16.mxu0 0
    %1381 = vmatpush1.bf16.msra.mxu0 0
    %1382 = vmatprep.subr.bf16.mxu0 0
    %1383 = vmatpush1.bf16.msra.mxu0 0
    %1384 = vmatprep.subr.bf16.mxu0 0
    %1385 = vmatpush1.bf16.msra.mxu0 0
    %1386 = vmatprep.subr.bf16.mxu0 0
    %1387 = vmatpush1.bf16.msra.mxu0 0
    %1388 = vmatprep.subr.bf16.mxu0 0
    %1389 = vmatpush1.bf16.msra.mxu0 0
    %1390 = vmatprep.subr.bf16.mxu0 0
    %1391 = vmatpush1.bf16.msra.mxu0 0
    %1392 = vmatprep.subr.bf16.mxu0 0
    %1393 = vmatpush1.bf16.msra.mxu0 0
    %1394 = vmatprep.subr.bf16.mxu0 0
    %1395 = vmatpush1.bf16.msra.mxu0 0
    %1396 = vmatprep.subr.bf16.mxu0 0
    %1397 = vmatpush1.bf16.msra.mxu0 0
    %1398 = vmatprep.subr.bf16.mxu0 0
    %1399 = vmatpush1.bf16.msra.mxu0 0
    %1400 = vmatprep.subr.bf16.mxu0 0
    %1401 = vmatpush1.bf16.msra.mxu0 0
    %1402 = vmatprep.subr.bf16.mxu0 0
    %1403 = vmatpush1.bf16.msra.mxu0 0
    %1404 = vmatprep.mubr.bf16.mxu0 0
    %1405 = vmatmul.mubr.bf16.gmra.mrb[0].mxu0 %v1370
    %v1406 = vpop.f32.mrb[0].mxu0
    %v1407 = vadd.f32 0.0, %v1406
    %v1408 = vpop.f32.mrb[0].mxu0
    %v1409 = vpop.f32.mrb[0].mxu0
    %v1410 = vpop.f32.mrb[0].mxu0
    %1411 = vdwg.mxu0
    %v1413 = vrot.slane %v1407, 2
    %v1415 = vadd.f32 %v825, %v1413
    %v1416 = vmul.f32 %v1415, 0.5
    %v1417 = vtanh.pop %v1416
    %v1418 = vmul.f32 %v1417, 0.5
    %v1419 = vadd.f32 %v1418, 0.5
    %v1420 = vtanh.pop %v1415
    %v1422 = vrot.slane %v1357, 6
    %v1424 = vmul.f32 %v1419, %v1422
    %1426 = vrot.lane.b32.xlu0 %v1420, 64
    %v1427 = vpop.permute.xlu0 %1426
    %v1429 = vmul.f32 %v1419, %v1427
    %1431 = vrot.lane.b32.xlu0 %v1429, 32
    %v1432 = vpop.permute.xlu0 %1431
    %v1434 = vadd.f32 %v1424, %v1432
    %v1435 = vtanh.pop %v1434
    %1437 = vrot.lane.b32.xlu0 %v1435, 64
    %v1438 = vpop.permute.xlu0 %1437
    %v1440 = vmul.f32 %v1419, %v1438
    %v1441 = vpack.c.bf16 %v1440, %v1440
    %v1442 = vld [vmem:[%s7] sm:$0xf]
    %v1443 = vld [vmem:[%s7 + $0x4] sm:$0xf]
    %v1444 = vld [vmem:[%s7 + $0x8] sm:$0xf]
    %v1445 = vld [vmem:[%s7 + $0xc] sm:$0xf]
    %v1446 = vld [vmem:[%s8] sm:$0x1]
    %v1448 = vlaneseq
    %v1449 = vshrl.u32 %v1448, 7
    %v1450 = vsub.s32 0, %v1449
    %v1451 = vrot.slane %v1446, %v1450
    %v1454 = vrot.slane %v1441, 3
    %1455 = vrot.lane.b32.xlu0 %v1454, 32
    %v1456 = vpop.permute.xlu0 %1455
    %v1461 = vunpack.c.l.b16 %v1442
    %v1462 = vunpack.c.l.b16 %v1443
    %v1463 = vunpack.c.l.b16 %v1444
    %v1464 = vunpack.c.l.b16 %v1445
    %v1465 = vpack.c.b16 %v1462, %v1461
    %v1466 = vpack.c.b16 %v1464, %v1463
    %v1470 = vsel %vm113, %v1456, 0
    %1472 = vmatprep.subr.bf16.mxu0 0
    %1473 = vmatpush1.bf16.msra.mxu0 %v1465
    %1474 = vmatprep.subr.bf16.mxu0 0
    %1475 = vmatpush1.bf16.msra.mxu0 %v1466
    %1476 = vmatprep.subr.bf16.mxu0 0
    %1477 = vmatpush1.bf16.msra.mxu0 0
    %1478 = vmatprep.subr.bf16.mxu0 0
    %1479 = vmatpush1.bf16.msra.mxu0 0
    %1480 = vmatprep.subr.bf16.mxu0 0
    %1481 = vmatpush1.bf16.msra.mxu0 0
    %1482 = vmatprep.subr.bf16.mxu0 0
    %1483 = vmatpush1.bf16.msra.mxu0 0
    %1484 = vmatprep.subr.bf16.mxu0 0
    %1485 = vmatpush1.bf16.msra.mxu0 0
    %1486 = vmatprep.subr.bf16.mxu0 0
    %1487 = vmatpush1.bf16.msra.mxu0 0
    %1488 = vmatprep.subr.bf16.mxu0 0
    %1489 = vmatpush1.bf16.msra.mxu0 0
    %1490 = vmatprep.subr.bf16.mxu0 0
    %1491 = vmatpush1.bf16.msra.mxu0 0
    %1492 = vmatprep.subr.bf16.mxu0 0
    %1493 = vmatpush1.bf16.msra.mxu0 0
    %1494 = vmatprep.subr.bf16.mxu0 0
    %1495 = vmatpush1.bf16.msra.mxu0 0
    %1496 = vmatprep.subr.bf16.mxu0 0
    %1497 = vmatpush1.bf16.msra.mxu0 0
    %1498 = vmatprep.subr.bf16.mxu0 0
    %1499 = vmatpush1.bf16.msra.mxu0 0
    %1500 = vmatprep.subr.bf16.mxu0 0
    %1501 = vmatpush1.bf16.msra.mxu0 0
    %1502 = vmatprep.subr.bf16.mxu0 0
    %1503 = vmatpush1.bf16.msra.mxu0 0
    %1504 = vmatprep.mubr.bf16.mxu0 0
    %1505 = vmatmul.mubr.bf16.gmra.mrb[0].mxu0 %v1470
    %v1506 = vpop.f32.mrb[0].mxu0
    %v1507 = vadd.f32 %v1451, %v1506
    %v1508 = vpop.f32.mrb[0].mxu0
    %v1509 = vpop.f32.mrb[0].mxu0
    %v1510 = vpop.f32.mrb[0].mxu0
    %1511 = vdwg.mxu0
    %vm1512 = vcmask 58368
    %1513 = vst.msk [vmem:[#allocation3] sm:$0x3] %vm1512, %v1507
    // Predicated region
    $region38: #{lstm_model_forward.1} parent=1 // pred_check
      _
    $region39: #{lstm_model_forward.1} parent=1 // pred_check_branch
      %1515 = sbr.rel (0) target = $region41
    $region40: #{lstm_model_forward.1} parent=1 // pred_region
      %s1517 = ssub.s32 32, 32
      %1518 = vsyncadd [#allocation4], %s1517
      %s1520 = sshll.u32 [#allocation3], 4
      %s1521 = int_to_ptr.vmem [resolvable:$true] %s1520
      %1523 = dma.vmem_to_hbm [thread:$0]  %s1521, 32, %s9, [#allocation4]
    $region41: #{lstm_model_forward.1} parent=1 // pred_fallthru
      _
    // Predicated region
    $region42: #{lstm_model_forward.1} parent=1 // pred_check
      _
    $region43: #{lstm_model_forward.1} parent=1 // pred_check_branch
      %1525 = sbr.rel (0) target = $region45
    $region44: #{lstm_model_forward.1} parent=1 // pred_region
      %1526 = dma.done [#allocation4], 32
    $region45: #{lstm_model_forward.1} parent=1 // pred_fallthru
      _
    %1527 = vsyncpa [#allocation4], 1

</llo_original>
